<compile_context>
chip_gen: v7x
topology: tpu7x:2x2x1
jax: 0.10.0
libtpu: 0.0.40
codegen_flags: <defaults>
</compile_context>

<pallas_src>
import math

import jax
import jax.numpy as jnp
from jax.experimental import pallas as pl
from jax.experimental.pallas import tpu as pltpu


# --------------------------------------------------------------------------
# GRU recurrence kernel (grid over time chunks; hidden carried in VMEM scratch)
# --------------------------------------------------------------------------
def _gru_kernel(h0_ref, x_ref, wi_ref, wh_ref, bgi_ref, bhn_ref,
                hall_ref, hN_ref, h_scr, gi_scr):
    """One grid step = one chunk of Tc time steps (full padded batch Bp).

    h0_ref  : (1, Bp, H)      initial hidden (read at the first chunk only)
    x_ref   : (Tc*Bp, H)      embedded inputs, time-major rows (t*Bp + b)
    wi_ref  : (H, 3H)         fused input->gate weights  [r | z | n]
    wh_ref  : (H, 3H)         fused hidden->gate weights [r | z | n]
    bgi_ref : (1, 3H)         b_i with b_h's r/z halves pre-added
    bhn_ref : (1, H)          hidden bias of the n gate
    hall_ref: (Tc*Bp, H)      per-step hidden states (time-major output block)
    hN_ref  : (1, Bp, H)      final hidden state (written on last chunk only)
    h_scr   : (Bp, H)  VMEM   running hidden state carried across chunks
    gi_scr  : (Tc*Bp, 3H) VMEM  hoisted x-projection for the whole chunk
    """
    c = pl.program_id(0)                      # time-chunk index (sequential)
    Bp, H = h_scr.shape
    Tc = x_ref.shape[0] // Bp

    @pl.when(c == 0)
    def _init():
        h_scr[...] = h0_ref[0].astype(jnp.float32)

    w_h = wh_ref[...]                          # (H, 3H), resident

    # -- Hoisted input projection: ONE (Tc*Bp, H) @ (H, 3H) matmul per chunk.
    #    bgi already contains b_i + [b_h_r, b_h_z, 0] (fused in the wrapper),
    #    so r/z need no further bias inside the loop.
    gi_scr[...] = (
        jnp.dot(x_ref[...], wi_ref[...], preferred_element_type=jnp.float32)
        + bgi_ref[...])

    # Hoist the n-gate hidden-bias broadcast out of the time loop.
    b_hn = jnp.broadcast_to(bhn_ref[...], (Bp, H))

    def step(t, h):
        row = pl.multiple_of(t * Bp, Bp)       # tile-aligned slab offset
        gi = gi_scr[pl.ds(row, Bp), :]         # (Bp, 3H) f32, precomputed
        gh = jnp.dot(h.astype(w_h.dtype), w_h,
                     preferred_element_type=jnp.float32)   # (Bp, 3H)
        # PyTorch GRU equations, gate order (r, z, n); gate math kept in f32
        # (important for v5e, and for parity of the carried hidden state).
        # NOTE: with H a multiple of 128 these slices are lane-aligned.
        rz = jax.nn.sigmoid(gi[:, :2 * H] + gh[:, :2 * H])
        r, z = rz[:, :H], rz[:, H:]
        n = jnp.tanh(gi[:, 2 * H:] + r * (gh[:, 2 * H:] + b_hn))
        h = n + z * (h - n)                    # == (1 - z) * n + z * h
        # Dense, unmasked (Bp, H) slab store; one HBM writeback per chunk.
        hall_ref[pl.ds(row, Bp), :] = h.astype(hall_ref.dtype)
        return h

    h = jax.lax.fori_loop(0, Tc, step, h_scr[...], unroll=True)
    h_scr[...] = h

    @pl.when(c == pl.num_programs(0) - 1)
    def _final():
        hN_ref[0] = h.astype(hN_ref.dtype)


# --------------------------------------------------------------------------
# Final Linear projection: lane-dense, row-tiled (N, H) @ (H, Vp) matmul
# --------------------------------------------------------------------------
def _fc_kernel(x_ref, w_ref, b_ref, o_ref):
    o_ref[...] = (jnp.dot(x_ref[...].astype(w_ref.dtype), w_ref[...],
                          preferred_element_type=jnp.float32)
                  + b_ref[...]).astype(o_ref.dtype)


def _resident_spec(shape, single_buffer):
    """BlockSpec for a block that is identical at every grid step."""
    nd = len(shape)

    def idx(i):
        return (0,) * nd

    if single_buffer:
        # Constant index_map => the second pipeline buffer is pure VMEM waste
        # (halves resident-weight VMEM; matters at realistic H on v7x).
        return pl.BlockSpec(shape, idx, pipeline_mode=pl.Buffered(1))
    return pl.BlockSpec(shape, idx)


def _linear(x, w, b, *, single_buffer_weights=True, cost=None):
    n, h = x.shape
    vp = w.shape[1]
    tn = n if n % 256 else 256                 # row tile (N "parallel" axis)
    return pl.pallas_call(
        _fc_kernel,
        out_shape=jax.ShapeDtypeStruct((n, vp), jnp.float32),
        grid_spec=pltpu.PrefetchScalarGridSpec(
            num_scalar_prefetch=0,
            grid=(n // tn,),
            in_specs=[
                pl.BlockSpec((tn, h), lambda i: (i, 0)),
                _resident_spec((h, vp), single_buffer_weights),
                _resident_spec((1, vp), single_buffer_weights),
            ],
            out_specs=pl.BlockSpec((tn, vp), lambda i: (i, 0)),
        ),
        compiler_params=pltpu.CompilerParams(
            dimension_semantics=("parallel",)),
        cost_estimate=cost,
    )(x, w, b)


# --------------------------------------------------------------------------
# Wrapper: embedding gather (glue) -> GRU kernel -> fc kernel -> row reorder
# --------------------------------------------------------------------------
def char_gru_forward(tokens, hidden, params, *, time_chunk=None,
                     matmul_dtype=jnp.float32, single_buffer_weights=True):
    """tokens (B,T) int32, hidden (1,B,H) f32 -> (logits (B*T,V), hidden (1,B,H))."""
    B, T = tokens.shape
    V, H = params["embed"].shape

    if time_chunk is None:
        time_chunk = next(c for c in (32, 16, 8, 4, 2, 1) if T % c == 0)
    Tc = min(time_chunk, T)
    assert T % Tc == 0, "time_chunk must divide T"
    n_c = T // Tc

    # Pad batch to the f32 sublane tile (8) so every slab store is unmasked.
    Bp = ((B + 7) // 8) * 8

    # Embedding gather, time-major.  (TODO(synk): fuse into the kernel.)
    x_tm = jnp.take(params["embed"], tokens.T, axis=0)          # (T, B, H)
    h0 = hidden
    if Bp != B:
        x_tm = jnp.pad(x_tm, ((0, 0), (0, Bp - B), (0, 0)))
        h0 = jnp.pad(hidden, ((0, 0), (0, Bp - B), (0, 0)))
    x2d = x_tm.reshape(T * Bp, H).astype(matmul_dtype)           # free reshape

    # Fused biases: b_gi = b_i + [b_h_r, b_h_z, 0]; b_hn kept separate because
    # PyTorch multiplies it by r inside the n gate.
    b_i, b_h = params["b_i"], params["b_h"]
    b_gi = (b_i + jnp.concatenate(
        [b_h[:, :2 * H], jnp.zeros((1, H), b_h.dtype)], axis=-1)
            ).astype(jnp.float32)
    b_hn = b_h[:, 2 * H:].astype(jnp.float32)
    w_i = params["W_i"].astype(matmul_dtype)
    w_h = params["W_h"].astype(matmul_dtype)

    gru_cost = pl.CostEstimate(
        flops=int(4 * T * Bp * H * 3 * H + 12 * T * Bp * H),
        transcendentals=int(3 * T * Bp * H),
        bytes_accessed=int(x2d.size * x2d.dtype.itemsize
                           + T * Bp * H * 4
                           + (w_i.size + w_h.size) * w_i.dtype.itemsize),
    )

    grid_spec = pltpu.PrefetchScalarGridSpec(
        num_scalar_prefetch=0,
        grid=(n_c,),
        in_specs=[
            pl.BlockSpec((1, Bp, H), lambda c: (0, 0, 0)),        # h0
            pl.BlockSpec((Tc * Bp, H), lambda c: (c, 0)),         # x time chunk
            _resident_spec((H, 3 * H), single_buffer_weights),    # W_i
            _resident_spec((H, 3 * H), single_buffer_weights),    # W_h
            _resident_spec((1, 3 * H), single_buffer_weights),    # fused b_i
            _resident_spec((1, H), single_buffer_weights),        # b_hn
        ],
        out_specs=(
            pl.BlockSpec((Tc * Bp, H), lambda c: (c, 0)),         # hidden states
            pl.BlockSpec((1, Bp, H), lambda c: (0, 0, 0)),        # final hidden
        ),
        scratch_shapes=[
            pltpu.VMEM((Bp, H), jnp.float32),           # carried hidden state
            pltpu.VMEM((Tc * Bp, 3 * H), jnp.float32),  # hoisted x-projection
        ],
    )

    h_all, h_n = pl.pallas_call(
        _gru_kernel,
        out_shape=(
            jax.ShapeDtypeStruct((T * Bp, H), jnp.float32),       # time-major
            jax.ShapeDtypeStruct((1, Bp, H), jnp.float32),
        ),
        grid_spec=grid_spec,
        compiler_params=pltpu.CompilerParams(
            # Single sequential axis: the h_scr carry requires in-order chunks.
            dimension_semantics=("arbitrary",)),
        cost_estimate=gru_cost,
    )(h0, x2d, w_i, w_h, b_gi, b_hn)

    # fc on time-major rows; pad vocab to a 128-lane multiple => dense stores.
    Vp = ((V + 127) // 128) * 128
    w_fc = params["W_fc"].astype(matmul_dtype)
    b_fc = params["b_fc"].astype(jnp.float32)
    if Vp != V:
        w_fc = jnp.pad(w_fc, ((0, 0), (0, Vp - V)))
        b_fc = jnp.pad(b_fc, ((0, 0), (0, Vp - V)))
    fc_cost = pl.CostEstimate(
        flops=int(2 * T * Bp * H * Vp),
        transcendentals=0,
        bytes_accessed=int(T * Bp * (H + Vp) * 4
                           + H * Vp * w_fc.dtype.itemsize),
    )
    logits_tm = _linear(h_all, w_fc, b_fc,
                        single_buffer_weights=single_buffer_weights,
                        cost=fc_cost)                              # (T*Bp, Vp)

    # Undo the kernel-friendly (time-major, padded) layout with cheap XLA ops
    # on the small char-vocab logits tensor: PyTorch's out.reshape(-1, H) row
    # order is batch-major.
    logits = (logits_tm.reshape(T, Bp, Vp)[:, :B, :V]
              .transpose(1, 0, 2).reshape(B * T, V))
    h_final = h_n[:, :B, :]
    return logits, h_final


# --------------------------------------------------------------------------
# Pure-JAX reference of the PyTorch CharGRU forward
# --------------------------------------------------------------------------
def ref_forward(tokens, hidden, params):
    emb = params["embed"][tokens]       # (B, T, H)
    B, T, H = emb.shape
    h = hidden[0]
    outs = []
    for t in range(T):
        x_t = emb[:, t]
        gi = x_t @ params["W_i"] + params["b_i"]
        gh = h @ params["W_h"] + params["b_h"]
        r = jax.nn.sigmoid(gi[:, 0:H] + gh[:, 0:H])
        z = jax.nn.sigmoid(gi[:, H:2 * H] + gh[:, H:2 * H])
        n = jnp.tanh(gi[:, 2 * H:] + r * gh[:, 2 * H:])
        h = (1.0 - z) * n + z * h
        outs.append(h)
    out = jnp.stack(outs, axis=1).reshape(-1, H)
    logits = out @ params["W_fc"] + params["b_fc"]
    return logits, h[None]


def init_params(key, vocab_size, hidden_size):
    H, V = hidden_size, vocab_size
    ks = jax.random.split(key, 8)
    s = 1.0 / math.sqrt(H)
    u = lambda k, shape: jax.random.uniform(k, shape, jnp.float32, -s, s)
    return {
        "embed": jax.random.normal(ks[0], (V, H), jnp.float32),
        # Fused GRU weights/biases, gate order (r, z, n), laid out for x @ W.
        "W_i": u(ks[1], (H, 3 * H)),
        "W_h": u(ks[2], (H, 3 * H)),
        "b_i": u(ks[3], (1, 3 * H)),
        "b_h": u(ks[4], (1, 3 * H)),
        "W_fc": u(ks[5], (H, V)),
        "b_fc": u(ks[6], (1, V)),
    }


if __name__ == "__main__":
    vocab_size, hidden_size = 64, 32
    batch, seq = 2, 8

    params = init_params(jax.random.PRNGKey(42), vocab_size, hidden_size)

    key = jax.random.PRNGKey(0)
    tokens = jax.random.randint(key, (batch, seq), 0, vocab_size, dtype=jnp.int32)
    hidden0 = jnp.zeros((1, batch, hidden_size), jnp.float32)   # init_hidden

    def run(**kw):
        try:
            return char_gru_forward(tokens, hidden0, params, time_chunk=4, **kw)
        except Exception:
            # pipeline_mode=pl.Buffered(1) (single-buffered resident weights,
            # a v7x VMEM optimization) is an experimental knob; fall back to
            # default double buffering if this JAX/Mosaic build rejects it.
            return char_gru_forward(tokens, hidden0, params, time_chunk=4,
                                    single_buffer_weights=False, **kw)

    # f32 path (exact parity with the PyTorch formulation); time_chunk=4 also
    # exercises the cross-chunk hidden-state carry (2 chunks of 4 steps).
    logits, h_final = jax.block_until_ready(run())
    ref_logits, ref_h = ref_forward(tokens, hidden0, params)
    assert logits.shape == (batch * seq, vocab_size)
    assert h_final.shape == (1, batch, hidden_size)
    assert jnp.allclose(logits, ref_logits, atol=1e-2, rtol=1e-2)
    assert jnp.allclose(h_final, ref_h, atol=1e-2, rtol=1e-2)

    # bf16 matmul operands (f32 accumulation + f32 gate math/carried hidden):
    # the recommended configuration at realistic H on v6e/v7x.
    logits_bf, h_bf = jax.block_until_ready(run(matmul_dtype=jnp.bfloat16))
    assert jnp.allclose(logits_bf, ref_logits, atol=2e-1, rtol=2e-1)
    assert jnp.allclose(h_bf, ref_h, atol=2e-1, rtol=2e-1)

    print("KERNEL_OK")
</pallas_src>

<mosaic_0001>
module attributes {stable_mosaic.version = 11 : i64} {
  func.func @_gru_kernel(%arg0: i32, %arg1: memref<1x8x32xf32, #tpu.memory_space<vmem>>, %arg2: memref<32x32xf32, #tpu.memory_space<vmem>>, %arg3: memref<32x96xf32, #tpu.memory_space<vmem>>, %arg4: memref<32x96xf32, #tpu.memory_space<vmem>>, %arg5: memref<1x96xf32, #tpu.memory_space<vmem>>, %arg6: memref<1x32xf32, #tpu.memory_space<vmem>>, %arg7: memref<32x32xf32, #tpu.memory_space<vmem>>, %arg8: memref<1x8x32xf32, #tpu.memory_space<vmem>>, %arg9: memref<8x32xf32, #tpu.memory_space<vmem>>, %arg10: memref<32x96xf32, #tpu.memory_space<vmem>>) attributes {dimension_semantics = [#tpu.dimension_semantics<arbitrary>], iteration_bounds = array<i64: 2>, scalar_prefetch = 0 : i64, scratch_operands = 2 : i64, tpu.core_type = #tpu.core_type<tc>, window_params = [{pipeline_mode = #tpu.pipeline_mode<synchronous>, transform_indices = @transform_0, window_bounds = array<i64: 1, 8, 32>}, {transform_indices = @transform_1, window_bounds = array<i64: 32, 32>}, {pipeline_mode = #tpu.pipeline_mode<synchronous>, transform_indices = @transform_2, window_bounds = array<i64: 32, 96>}, {pipeline_mode = #tpu.pipeline_mode<synchronous>, transform_indices = @transform_3, window_bounds = array<i64: 32, 96>}, {pipeline_mode = #tpu.pipeline_mode<synchronous>, transform_indices = @transform_4, window_bounds = array<i64: 1, 96>}, {pipeline_mode = #tpu.pipeline_mode<synchronous>, transform_indices = @transform_5, window_bounds = array<i64: 1, 32>}, {transform_indices = @transform_6, window_bounds = array<i64: 32, 32>}, {pipeline_mode = #tpu.pipeline_mode<synchronous>, transform_indices = @transform_7, window_bounds = array<i64: 1, 8, 32>}]} {
    %c0_i32 = arith.constant 0 : i32
    %0 = arith.cmpi eq, %arg0, %c0_i32 : i32
    %1 = arith.extui %0 : i1 to i32
    %c0_i32_0 = arith.constant 0 : i32
    %2 = arith.cmpi ne, %1, %c0_i32_0 : i32
    scf.if %2 {
      %c0_38 = arith.constant 0 : index
      %c0_39 = arith.constant 0 : index
      %c0_40 = arith.constant 0 : index
      %123 = vector.load %arg1[%c0_38, %c0_39, %c0_40] : memref<1x8x32xf32, #tpu.memory_space<vmem>>, vector<1x8x32xf32>
      %124 = vector.shape_cast %123 : vector<1x8x32xf32> to vector<8x32xf32>
      %c0_41 = arith.constant 0 : index
      %c0_42 = arith.constant 0 : index
      %125 = vector.load %arg9[%c0_41, %c0_42] : memref<8x32xf32, #tpu.memory_space<vmem>>, vector<8x32xf32>
      tpu.vector_store %arg9[%c0_41, %c0_42], %124 {strides = array<i32>} : memref<8x32xf32, #tpu.memory_space<vmem>>, vector<8x32xf32>,
    } else {
    }
    %c0 = arith.constant 0 : index
    %c0_1 = arith.constant 0 : index
    %3 = vector.load %arg4[%c0, %c0_1] : memref<32x96xf32, #tpu.memory_space<vmem>>, vector<32x96xf32>
    %c0_2 = arith.constant 0 : index
    %c0_3 = arith.constant 0 : index
    %4 = vector.load %arg2[%c0_2, %c0_3] : memref<32x32xf32, #tpu.memory_space<vmem>>, vector<32x32xf32>
    %c0_4 = arith.constant 0 : index
    %c0_5 = arith.constant 0 : index
    %5 = vector.load %arg3[%c0_4, %c0_5] : memref<32x96xf32, #tpu.memory_space<vmem>>, vector<32x96xf32>
    %cst = arith.constant dense<0.000000e+00> : vector<32x96xf32>
    %6 = tpu.matmul %4, %5, %cst {dimension_numbers = #tpu.dot_dimension_numbers<[1], [0], [0], [1], [0, 0, 1, 1], [], []>} : vector<32x32xf32>, vector<32x96xf32>, vector<32x96xf32> -> vector<32x96xf32>
    %c0_6 = arith.constant 0 : index
    %c0_7 = arith.constant 0 : index
    %7 = vector.load %arg5[%c0_6, %c0_7] : memref<1x96xf32, #tpu.memory_space<vmem>>, vector<1x96xf32>
    %8 = vector.broadcast %7 : vector<1x96xf32> to vector<32x96xf32>
    %9 = arith.addf %6, %8 : vector<32x96xf32>
    %c0_8 = arith.constant 0 : index
    %c0_9 = arith.constant 0 : index
    %10 = vector.load %arg10[%c0_8, %c0_9] : memref<32x96xf32, #tpu.memory_space<vmem>>, vector<32x96xf32>
    tpu.vector_store %arg10[%c0_8, %c0_9], %9 {strides = array<i32>} : memref<32x96xf32, #tpu.memory_space<vmem>>, vector<32x96xf32>,
    %c0_10 = arith.constant 0 : index
    %c0_11 = arith.constant 0 : index
    %11 = vector.load %arg6[%c0_10, %c0_11] : memref<1x32xf32, #tpu.memory_space<vmem>>, vector<1x32xf32>
    %12 = vector.shape_cast %11 : vector<1x32xf32> to vector<1x32xf32>
    %13 = vector.broadcast %12 : vector<1x32xf32> to vector<8x32xf32>
    %c0_12 = arith.constant 0 : index
    %c0_13 = arith.constant 0 : index
    %14 = vector.load %arg9[%c0_12, %c0_13] : memref<8x32xf32, #tpu.memory_space<vmem>>, vector<8x32xf32>
    %c0_i32_14 = arith.constant 0 : i32
    %c8_i32 = arith.constant 8 : i32
    %15 = arith.muli %c0_i32_14, %c8_i32 : i32
    %16 = tpu.assume_multiple %15, 8 : i32
    %17 = arith.index_cast %16 : i32 to index
    %c0_15 = arith.constant 0 : index
    %18 = vector.load %arg10[%17, %c0_15] : memref<32x96xf32, #tpu.memory_space<vmem>>, vector<8x96xf32>
    %cst_16 = arith.constant dense<0.000000e+00> : vector<8x96xf32>
    %19 = tpu.matmul %14, %3, %cst_16 {dimension_numbers = #tpu.dot_dimension_numbers<[1], [0], [0], [1], [0, 0, 1, 1], [], []>} : vector<8x32xf32>, vector<32x96xf32>, vector<8x96xf32> -> vector<8x96xf32>
    %20 = vector.extract_strided_slice %18 {offsets = [0, 0], sizes = [8, 64], strides = [1, 1]} : vector<8x96xf32> to vector<8x64xf32>
    %21 = vector.extract_strided_slice %19 {offsets = [0, 0], sizes = [8, 64], strides = [1, 1]} : vector<8x96xf32> to vector<8x64xf32>
    %22 = arith.addf %20, %21 : vector<8x64xf32>
    %23 = arith.negf %22 : vector<8x64xf32>
    %24 = math.exp %23 : vector<8x64xf32>
    %cst_17 = arith.constant 1.000000e+00 : f32
    %25 = vector.broadcast %cst_17 : f32 to vector<8x64xf32>
    %26 = arith.addf %25, %24 : vector<8x64xf32>
    %27 = arith.divf %25, %26 : vector<8x64xf32>
    %28 = vector.extract_strided_slice %27 {offsets = [0, 0], sizes = [8, 32], strides = [1, 1]} : vector<8x64xf32> to vector<8x32xf32>
    %29 = vector.extract_strided_slice %27 {offsets = [0, 32], sizes = [8, 32], strides = [1, 1]} : vector<8x64xf32> to vector<8x32xf32>
    %30 = vector.extract_strided_slice %18 {offsets = [0, 64], sizes = [8, 32], strides = [1, 1]} : vector<8x96xf32> to vector<8x32xf32>
    %31 = vector.extract_strided_slice %19 {offsets = [0, 64], sizes = [8, 32], strides = [1, 1]} : vector<8x96xf32> to vector<8x32xf32>
    %32 = arith.addf %31, %13 : vector<8x32xf32>
    %33 = arith.mulf %28, %32 : vector<8x32xf32>
    %34 = arith.addf %30, %33 : vector<8x32xf32>
    %35 = math.tanh %34 : vector<8x32xf32>
    %36 = arith.subf %14, %35 : vector<8x32xf32>
    %37 = arith.mulf %29, %36 : vector<8x32xf32>
    %38 = arith.addf %35, %37 : vector<8x32xf32>
    %39 = arith.index_cast %16 : i32 to index
    %c0_18 = arith.constant 0 : index
    %40 = vector.load %arg7[%39, %c0_18] : memref<32x32xf32, #tpu.memory_space<vmem>>, vector<8x32xf32>
    tpu.vector_store %arg7[%39, %c0_18], %38 {strides = array<i32>} : memref<32x32xf32, #tpu.memory_space<vmem>>, vector<8x32xf32>,
    %c1_i32 = arith.constant 1 : i32
    %c8_i32_19 = arith.constant 8 : i32
    %41 = arith.muli %c1_i32, %c8_i32_19 : i32
    %42 = tpu.assume_multiple %41, 8 : i32
    %43 = arith.index_cast %42 : i32 to index
    %c0_20 = arith.constant 0 : index
    %44 = vector.load %arg10[%43, %c0_20] : memref<32x96xf32, #tpu.memory_space<vmem>>, vector<8x96xf32>
    %cst_21 = arith.constant dense<0.000000e+00> : vector<8x96xf32>
    %45 = tpu.matmul %38, %3, %cst_21 {dimension_numbers = #tpu.dot_dimension_numbers<[1], [0], [0], [1], [0, 0, 1, 1], [], []>} : vector<8x32xf32>, vector<32x96xf32>, vector<8x96xf32> -> vector<8x96xf32>
    %46 = vector.extract_strided_slice %44 {offsets = [0, 0], sizes = [8, 64], strides = [1, 1]} : vector<8x96xf32> to vector<8x64xf32>
    %47 = vector.extract_strided_slice %45 {offsets = [0, 0], sizes = [8, 64], strides = [1, 1]} : vector<8x96xf32> to vector<8x64xf32>
    %48 = arith.addf %46, %47 : vector<8x64xf32>
    %49 = arith.negf %48 : vector<8x64xf32>
    %50 = math.exp %49 : vector<8x64xf32>
    %cst_22 = arith.constant 1.000000e+00 : f32
    %51 = vector.broadcast %cst_22 : f32 to vector<8x64xf32>
    %52 = arith.addf %51, %50 : vector<8x64xf32>
    %53 = arith.divf %51, %52 : vector<8x64xf32>
    %54 = vector.extract_strided_slice %53 {offsets = [0, 0], sizes = [8, 32], strides = [1, 1]} : vector<8x64xf32> to vector<8x32xf32>
    %55 = vector.extract_strided_slice %53 {offsets = [0, 32], sizes = [8, 32], strides = [1, 1]} : vector<8x64xf32> to vector<8x32xf32>
    %56 = vector.extract_strided_slice %44 {offsets = [0, 64], sizes = [8, 32], strides = [1, 1]} : vector<8x96xf32> to vector<8x32xf32>
    %57 = vector.extract_strided_slice %45 {offsets = [0, 64], sizes = [8, 32], strides = [1, 1]} : vector<8x96xf32> to vector<8x32xf32>
    %58 = arith.addf %57, %13 : vector<8x32xf32>
    %59 = arith.mulf %54, %58 : vector<8x32xf32>
    %60 = arith.addf %56, %59 : vector<8x32xf32>
    %61 = math.tanh %60 : vector<8x32xf32>
    %62 = arith.subf %38, %61 : vector<8x32xf32>
    %63 = arith.mulf %55, %62 : vector<8x32xf32>
    %64 = arith.addf %61, %63 : vector<8x32xf32>
    %65 = arith.index_cast %42 : i32 to index
    %c0_23 = arith.constant 0 : index
    %66 = vector.load %arg7[%65, %c0_23] : memref<32x32xf32, #tpu.memory_space<vmem>>, vector<8x32xf32>
    tpu.vector_store %arg7[%65, %c0_23], %64 {strides = array<i32>} : memref<32x32xf32, #tpu.memory_space<vmem>>, vector<8x32xf32>,
    %c2_i32 = arith.constant 2 : i32
    %c8_i32_24 = arith.constant 8 : i32
    %67 = arith.muli %c2_i32, %c8_i32_24 : i32
    %68 = tpu.assume_multiple %67, 8 : i32
    %69 = arith.index_cast %68 : i32 to index
    %c0_25 = arith.constant 0 : index
    %70 = vector.load %arg10[%69, %c0_25] : memref<32x96xf32, #tpu.memory_space<vmem>>, vector<8x96xf32>
    %cst_26 = arith.constant dense<0.000000e+00> : vector<8x96xf32>
    %71 = tpu.matmul %64, %3, %cst_26 {dimension_numbers = #tpu.dot_dimension_numbers<[1], [0], [0], [1], [0, 0, 1, 1], [], []>} : vector<8x32xf32>, vector<32x96xf32>, vector<8x96xf32> -> vector<8x96xf32>
    %72 = vector.extract_strided_slice %70 {offsets = [0, 0], sizes = [8, 64], strides = [1, 1]} : vector<8x96xf32> to vector<8x64xf32>
    %73 = vector.extract_strided_slice %71 {offsets = [0, 0], sizes = [8, 64], strides = [1, 1]} : vector<8x96xf32> to vector<8x64xf32>
    %74 = arith.addf %72, %73 : vector<8x64xf32>
    %75 = arith.negf %74 : vector<8x64xf32>
    %76 = math.exp %75 : vector<8x64xf32>
    %cst_27 = arith.constant 1.000000e+00 : f32
    %77 = vector.broadcast %cst_27 : f32 to vector<8x64xf32>
    %78 = arith.addf %77, %76 : vector<8x64xf32>
    %79 = arith.divf %77, %78 : vector<8x64xf32>
    %80 = vector.extract_strided_slice %79 {offsets = [0, 0], sizes = [8, 32], strides = [1, 1]} : vector<8x64xf32> to vector<8x32xf32>
    %81 = vector.extract_strided_slice %79 {offsets = [0, 32], sizes = [8, 32], strides = [1, 1]} : vector<8x64xf32> to vector<8x32xf32>
    %82 = vector.extract_strided_slice %70 {offsets = [0, 64], sizes = [8, 32], strides = [1, 1]} : vector<8x96xf32> to vector<8x32xf32>
    %83 = vector.extract_strided_slice %71 {offsets = [0, 64], sizes = [8, 32], strides = [1, 1]} : vector<8x96xf32> to vector<8x32xf32>
    %84 = arith.addf %83, %13 : vector<8x32xf32>
    %85 = arith.mulf %80, %84 : vector<8x32xf32>
    %86 = arith.addf %82, %85 : vector<8x32xf32>
    %87 = math.tanh %86 : vector<8x32xf32>
    %88 = arith.subf %64, %87 : vector<8x32xf32>
    %89 = arith.mulf %81, %88 : vector<8x32xf32>
    %90 = arith.addf %87, %89 : vector<8x32xf32>
    %91 = arith.index_cast %68 : i32 to index
    %c0_28 = arith.constant 0 : index
    %92 = vector.load %arg7[%91, %c0_28] : memref<32x32xf32, #tpu.memory_space<vmem>>, vector<8x32xf32>
    tpu.vector_store %arg7[%91, %c0_28], %90 {strides = array<i32>} : memref<32x32xf32, #tpu.memory_space<vmem>>, vector<8x32xf32>,
    %c3_i32 = arith.constant 3 : i32
    %c8_i32_29 = arith.constant 8 : i32
    %93 = arith.muli %c3_i32, %c8_i32_29 : i32
    %94 = tpu.assume_multiple %93, 8 : i32
    %95 = arith.index_cast %94 : i32 to index
    %c0_30 = arith.constant 0 : index
    %96 = vector.load %arg10[%95, %c0_30] : memref<32x96xf32, #tpu.memory_space<vmem>>, vector<8x96xf32>
    %cst_31 = arith.constant dense<0.000000e+00> : vector<8x96xf32>
    %97 = tpu.matmul %90, %3, %cst_31 {dimension_numbers = #tpu.dot_dimension_numbers<[1], [0], [0], [1], [0, 0, 1, 1], [], []>} : vector<8x32xf32>, vector<32x96xf32>, vector<8x96xf32> -> vector<8x96xf32>
    %98 = vector.extract_strided_slice %96 {offsets = [0, 0], sizes = [8, 64], strides = [1, 1]} : vector<8x96xf32> to vector<8x64xf32>
    %99 = vector.extract_strided_slice %97 {offsets = [0, 0], sizes = [8, 64], strides = [1, 1]} : vector<8x96xf32> to vector<8x64xf32>
    %100 = arith.addf %98, %99 : vector<8x64xf32>
    %101 = arith.negf %100 : vector<8x64xf32>
    %102 = math.exp %101 : vector<8x64xf32>
    %cst_32 = arith.constant 1.000000e+00 : f32
    %103 = vector.broadcast %cst_32 : f32 to vector<8x64xf32>
    %104 = arith.addf %103, %102 : vector<8x64xf32>
    %105 = arith.divf %103, %104 : vector<8x64xf32>
    %106 = vector.extract_strided_slice %105 {offsets = [0, 0], sizes = [8, 32], strides = [1, 1]} : vector<8x64xf32> to vector<8x32xf32>
    %107 = vector.extract_strided_slice %105 {offsets = [0, 32], sizes = [8, 32], strides = [1, 1]} : vector<8x64xf32> to vector<8x32xf32>
    %108 = vector.extract_strided_slice %96 {offsets = [0, 64], sizes = [8, 32], strides = [1, 1]} : vector<8x96xf32> to vector<8x32xf32>
    %109 = vector.extract_strided_slice %97 {offsets = [0, 64], sizes = [8, 32], strides = [1, 1]} : vector<8x96xf32> to vector<8x32xf32>
    %110 = arith.addf %109, %13 : vector<8x32xf32>
    %111 = arith.mulf %106, %110 : vector<8x32xf32>
    %112 = arith.addf %108, %111 : vector<8x32xf32>
    %113 = math.tanh %112 : vector<8x32xf32>
    %114 = arith.subf %90, %113 : vector<8x32xf32>
    %115 = arith.mulf %107, %114 : vector<8x32xf32>
    %116 = arith.addf %113, %115 : vector<8x32xf32>
    %117 = arith.index_cast %94 : i32 to index
    %c0_33 = arith.constant 0 : index
    %118 = vector.load %arg7[%117, %c0_33] : memref<32x32xf32, #tpu.memory_space<vmem>>, vector<8x32xf32>
    tpu.vector_store %arg7[%117, %c0_33], %116 {strides = array<i32>} : memref<32x32xf32, #tpu.memory_space<vmem>>, vector<8x32xf32>,
    %c4_i32 = arith.constant 4 : i32
    %c0_34 = arith.constant 0 : index
    %c0_35 = arith.constant 0 : index
    %119 = vector.load %arg9[%c0_34, %c0_35] : memref<8x32xf32, #tpu.memory_space<vmem>>, vector<8x32xf32>
    tpu.vector_store %arg9[%c0_34, %c0_35], %116 {strides = array<i32>} : memref<8x32xf32, #tpu.memory_space<vmem>>, vector<8x32xf32>,
    %c1_i32_36 = arith.constant 1 : i32
    %120 = arith.cmpi eq, %arg0, %c1_i32_36 : i32
    %121 = arith.extui %120 : i1 to i32
    %c0_i32_37 = arith.constant 0 : i32
    %122 = arith.cmpi ne, %121, %c0_i32_37 : i32
    scf.if %122 {
      %c0_38 = arith.constant 0 : index
      %c0_39 = arith.constant 0 : index
      %c0_40 = arith.constant 0 : index
      %123 = vector.load %arg8[%c0_38, %c0_39, %c0_40] : memref<1x8x32xf32, #tpu.memory_space<vmem>>, vector<1x8x32xf32>
      %124 = vector.shape_cast %123 : vector<1x8x32xf32> to vector<8x32xf32>
      %125 = vector.shape_cast %116 : vector<8x32xf32> to vector<1x8x32xf32>
      tpu.vector_store %arg8[%c0_38, %c0_39, %c0_40], %125 {strides = array<i32>} : memref<1x8x32xf32, #tpu.memory_space<vmem>>, vector<1x8x32xf32>,
    } else {
    }
    return
  }
  func.func @transform_0(%arg0: i32) -> (i32, i32, i32) {
    %c0_i32 = arith.constant 0 : i32
    %c0_i32_0 = arith.constant 0 : i32
    %c0_i32_1 = arith.constant 0 : i32
    %c0_i32_2 = arith.constant 0 : i32
    return %c0_i32, %c0_i32_0, %c0_i32_1 : i32, i32, i32
  }
  func.func @transform_1(%arg0: i32) -> (i32, i32) {
    %c0_i32 = arith.constant 0 : i32
    %c0_i32_0 = arith.constant 0 : i32
    return %arg0, %c0_i32 : i32, i32
  }
  func.func @transform_2(%arg0: i32) -> (i32, i32) {
    %c0_i32 = arith.constant 0 : i32
    %c0_i32_0 = arith.constant 0 : i32
    %c0_i32_1 = arith.constant 0 : i32
    return %c0_i32, %c0_i32_0 : i32, i32
  }
  func.func @transform_3(%arg0: i32) -> (i32, i32) {
    %c0_i32 = arith.constant 0 : i32
    %c0_i32_0 = arith.constant 0 : i32
    %c0_i32_1 = arith.constant 0 : i32
    return %c0_i32, %c0_i32_0 : i32, i32
  }
  func.func @transform_4(%arg0: i32) -> (i32, i32) {
    %c0_i32 = arith.constant 0 : i32
    %c0_i32_0 = arith.constant 0 : i32
    %c0_i32_1 = arith.constant 0 : i32
    return %c0_i32, %c0_i32_0 : i32, i32
  }
  func.func @transform_5(%arg0: i32) -> (i32, i32) {
    %c0_i32 = arith.constant 0 : i32
    %c0_i32_0 = arith.constant 0 : i32
    %c0_i32_1 = arith.constant 0 : i32
    return %c0_i32, %c0_i32_0 : i32, i32
  }
  func.func @transform_6(%arg0: i32) -> (i32, i32) {
    %c0_i32 = arith.constant 0 : i32
    %c0_i32_0 = arith.constant 0 : i32
    return %arg0, %c0_i32 : i32, i32
  }
  func.func @transform_7(%arg0: i32) -> (i32, i32, i32) {
    %c0_i32 = arith.constant 0 : i32
    %c0_i32_0 = arith.constant 0 : i32
    %c0_i32_1 = arith.constant 0 : i32
    %c0_i32_2 = arith.constant 0 : i32
    return %c0_i32, %c0_i32_0, %c0_i32_1 : i32, i32, i32
  }
}

module attributes {stable_mosaic.version = 11 : i64} {
  func.func @_gru_kernel(%arg0: i32, %arg1: memref<1x8x32xf32, #tpu.memory_space<vmem>>, %arg2: memref<32x32xf32, #tpu.memory_space<vmem>>, %arg3: memref<32x96xf32, #tpu.memory_space<vmem>>, %arg4: memref<32x96xf32, #tpu.memory_space<vmem>>, %arg5: memref<1x96xf32, #tpu.memory_space<vmem>>, %arg6: memref<1x32xf32, #tpu.memory_space<vmem>>, %arg7: memref<32x32xf32, #tpu.memory_space<vmem>>, %arg8: memref<1x8x32xf32, #tpu.memory_space<vmem>>, %arg9: memref<8x32xf32, #tpu.memory_space<vmem>>, %arg10: memref<32x96xf32, #tpu.memory_space<vmem>>) attributes {dimension_semantics = [#tpu.dimension_semantics<arbitrary>], iteration_bounds = array<i64: 2>, scalar_prefetch = 0 : i64, scratch_operands = 2 : i64, tpu.core_type = #tpu.core_type<tc>, window_params = [{pipeline_mode = #tpu.pipeline_mode<synchronous>, transform_indices = @transform_0, window_bounds = array<i64: 1, 8, 32>}, {transform_indices = @transform_1, window_bounds = array<i64: 32, 32>}, {pipeline_mode = #tpu.pipeline_mode<synchronous>, transform_indices = @transform_2, window_bounds = array<i64: 32, 96>}, {pipeline_mode = #tpu.pipeline_mode<synchronous>, transform_indices = @transform_3, window_bounds = array<i64: 32, 96>}, {pipeline_mode = #tpu.pipeline_mode<synchronous>, transform_indices = @transform_4, window_bounds = array<i64: 1, 96>}, {pipeline_mode = #tpu.pipeline_mode<synchronous>, transform_indices = @transform_5, window_bounds = array<i64: 1, 32>}, {transform_indices = @transform_6, window_bounds = array<i64: 32, 32>}, {pipeline_mode = #tpu.pipeline_mode<synchronous>, transform_indices = @transform_7, window_bounds = array<i64: 1, 8, 32>}]} {
    %c0_i32 = arith.constant 0 : i32
    %0 = arith.cmpi eq, %arg0, %c0_i32 : i32
    %1 = arith.extui %0 : i1 to i32
    %c0_i32_0 = arith.constant 0 : i32
    %2 = arith.cmpi ne, %1, %c0_i32_0 : i32
    scf.if %2 {
      %c0_38 = arith.constant 0 : index
      %c0_39 = arith.constant 0 : index
      %c0_40 = arith.constant 0 : index
      %123 = vector.load %arg1[%c0_38, %c0_39, %c0_40] : memref<1x8x32xf32, #tpu.memory_space<vmem>>, vector<1x8x32xf32>
      %124 = vector.shape_cast %123 : vector<1x8x32xf32> to vector<8x32xf32>
      %c0_41 = arith.constant 0 : index
      %c0_42 = arith.constant 0 : index
      %125 = vector.load %arg9[%c0_41, %c0_42] : memref<8x32xf32, #tpu.memory_space<vmem>>, vector<8x32xf32>
      tpu.vector_store %arg9[%c0_41, %c0_42], %124 {strides = array<i32>} : memref<8x32xf32, #tpu.memory_space<vmem>>, vector<8x32xf32>,
    } else {
    }
    %c0 = arith.constant 0 : index
    %c0_1 = arith.constant 0 : index
    %3 = vector.load %arg4[%c0, %c0_1] : memref<32x96xf32, #tpu.memory_space<vmem>>, vector<32x96xf32>
    %c0_2 = arith.constant 0 : index
    %c0_3 = arith.constant 0 : index
    %4 = vector.load %arg2[%c0_2, %c0_3] : memref<32x32xf32, #tpu.memory_space<vmem>>, vector<32x32xf32>
    %c0_4 = arith.constant 0 : index
    %c0_5 = arith.constant 0 : index
    %5 = vector.load %arg3[%c0_4, %c0_5] : memref<32x96xf32, #tpu.memory_space<vmem>>, vector<32x96xf32>
    %cst = arith.constant dense<0.000000e+00> : vector<32x96xf32>
    %6 = tpu.matmul %4, %5, %cst {dimension_numbers = #tpu.dot_dimension_numbers<[1], [0], [0], [1], [0, 0, 1, 1], [], []>} : vector<32x32xf32>, vector<32x96xf32>, vector<32x96xf32> -> vector<32x96xf32>
    %c0_6 = arith.constant 0 : index
    %c0_7 = arith.constant 0 : index
    %7 = vector.load %arg5[%c0_6, %c0_7] : memref<1x96xf32, #tpu.memory_space<vmem>>, vector<1x96xf32>
    %8 = vector.broadcast %7 : vector<1x96xf32> to vector<32x96xf32>
    %9 = arith.addf %6, %8 : vector<32x96xf32>
    %c0_8 = arith.constant 0 : index
    %c0_9 = arith.constant 0 : index
    %10 = vector.load %arg10[%c0_8, %c0_9] : memref<32x96xf32, #tpu.memory_space<vmem>>, vector<32x96xf32>
    tpu.vector_store %arg10[%c0_8, %c0_9], %9 {strides = array<i32>} : memref<32x96xf32, #tpu.memory_space<vmem>>, vector<32x96xf32>,
    %c0_10 = arith.constant 0 : index
    %c0_11 = arith.constant 0 : index
    %11 = vector.load %arg6[%c0_10, %c0_11] : memref<1x32xf32, #tpu.memory_space<vmem>>, vector<1x32xf32>
    %12 = vector.shape_cast %11 : vector<1x32xf32> to vector<1x32xf32>
    %13 = vector.broadcast %12 : vector<1x32xf32> to vector<8x32xf32>
    %c0_12 = arith.constant 0 : index
    %c0_13 = arith.constant 0 : index
    %14 = vector.load %arg9[%c0_12, %c0_13] : memref<8x32xf32, #tpu.memory_space<vmem>>, vector<8x32xf32>
    %c0_i32_14 = arith.constant 0 : i32
    %c8_i32 = arith.constant 8 : i32
    %15 = arith.muli %c0_i32_14, %c8_i32 : i32
    %16 = tpu.assume_multiple %15, 8 : i32
    %17 = arith.index_cast %16 : i32 to index
    %c0_15 = arith.constant 0 : index
    %18 = vector.load %arg10[%17, %c0_15] : memref<32x96xf32, #tpu.memory_space<vmem>>, vector<8x96xf32>
    %cst_16 = arith.constant dense<0.000000e+00> : vector<8x96xf32>
    %19 = tpu.matmul %14, %3, %cst_16 {dimension_numbers = #tpu.dot_dimension_numbers<[1], [0], [0], [1], [0, 0, 1, 1], [], []>} : vector<8x32xf32>, vector<32x96xf32>, vector<8x96xf32> -> vector<8x96xf32>
    %20 = vector.extract_strided_slice %18 {offsets = [0, 0], sizes = [8, 64], strides = [1, 1]} : vector<8x96xf32> to vector<8x64xf32>
    %21 = vector.extract_strided_slice %19 {offsets = [0, 0], sizes = [8, 64], strides = [1, 1]} : vector<8x96xf32> to vector<8x64xf32>
    %22 = arith.addf %20, %21 : vector<8x64xf32>
    %23 = arith.negf %22 : vector<8x64xf32>
    %24 = math.exp %23 : vector<8x64xf32>
    %cst_17 = arith.constant 1.000000e+00 : f32
    %25 = vector.broadcast %cst_17 : f32 to vector<8x64xf32>
    %26 = arith.addf %25, %24 : vector<8x64xf32>
    %27 = arith.divf %25, %26 : vector<8x64xf32>
    %28 = vector.extract_strided_slice %27 {offsets = [0, 0], sizes = [8, 32], strides = [1, 1]} : vector<8x64xf32> to vector<8x32xf32>
    %29 = vector.extract_strided_slice %27 {offsets = [0, 32], sizes = [8, 32], strides = [1, 1]} : vector<8x64xf32> to vector<8x32xf32>
    %30 = vector.extract_strided_slice %18 {offsets = [0, 64], sizes = [8, 32], strides = [1, 1]} : vector<8x96xf32> to vector<8x32xf32>
    %31 = vector.extract_strided_slice %19 {offsets = [0, 64], sizes = [8, 32], strides = [1, 1]} : vector<8x96xf32> to vector<8x32xf32>
    %32 = arith.addf %31, %13 : vector<8x32xf32>
    %33 = arith.mulf %28, %32 : vector<8x32xf32>
    %34 = arith.addf %30, %33 : vector<8x32xf32>
    %35 = math.tanh %34 : vector<8x32xf32>
    %36 = arith.subf %14, %35 : vector<8x32xf32>
    %37 = arith.mulf %29, %36 : vector<8x32xf32>
    %38 = arith.addf %35, %37 : vector<8x32xf32>
    %39 = arith.index_cast %16 : i32 to index
    %c0_18 = arith.constant 0 : index
    %40 = vector.load %arg7[%39, %c0_18] : memref<32x32xf32, #tpu.memory_space<vmem>>, vector<8x32xf32>
    tpu.vector_store %arg7[%39, %c0_18], %38 {strides = array<i32>} : memref<32x32xf32, #tpu.memory_space<vmem>>, vector<8x32xf32>,
    %c1_i32 = arith.constant 1 : i32
    %c8_i32_19 = arith.constant 8 : i32
    %41 = arith.muli %c1_i32, %c8_i32_19 : i32
    %42 = tpu.assume_multiple %41, 8 : i32
    %43 = arith.index_cast %42 : i32 to index
    %c0_20 = arith.constant 0 : index
    %44 = vector.load %arg10[%43, %c0_20] : memref<32x96xf32, #tpu.memory_space<vmem>>, vector<8x96xf32>
    %cst_21 = arith.constant dense<0.000000e+00> : vector<8x96xf32>
    %45 = tpu.matmul %38, %3, %cst_21 {dimension_numbers = #tpu.dot_dimension_numbers<[1], [0], [0], [1], [0, 0, 1, 1], [], []>} : vector<8x32xf32>, vector<32x96xf32>, vector<8x96xf32> -> vector<8x96xf32>
    %46 = vector.extract_strided_slice %44 {offsets = [0, 0], sizes = [8, 64], strides = [1, 1]} : vector<8x96xf32> to vector<8x64xf32>
    %47 = vector.extract_strided_slice %45 {offsets = [0, 0], sizes = [8, 64], strides = [1, 1]} : vector<8x96xf32> to vector<8x64xf32>
    %48 = arith.addf %46, %47 : vector<8x64xf32>
    %49 = arith.negf %48 : vector<8x64xf32>
    %50 = math.exp %49 : vector<8x64xf32>
    %cst_22 = arith.constant 1.000000e+00 : f32
    %51 = vector.broadcast %cst_22 : f32 to vector<8x64xf32>
    %52 = arith.addf %51, %50 : vector<8x64xf32>
    %53 = arith.divf %51, %52 : vector<8x64xf32>
    %54 = vector.extract_strided_slice %53 {offsets = [0, 0], sizes = [8, 32], strides = [1, 1]} : vector<8x64xf32> to vector<8x32xf32>
    %55 = vector.extract_strided_slice %53 {offsets = [0, 32], sizes = [8, 32], strides = [1, 1]} : vector<8x64xf32> to vector<8x32xf32>
    %56 = vector.extract_strided_slice %44 {offsets = [0, 64], sizes = [8, 32], strides = [1, 1]} : vector<8x96xf32> to vector<8x32xf32>
    %57 = vector.extract_strided_slice %45 {offsets = [0, 64], sizes = [8, 32], strides = [1, 1]} : vector<8x96xf32> to vector<8x32xf32>
    %58 = arith.addf %57, %13 : vector<8x32xf32>
    %59 = arith.mulf %54, %58 : vector<8x32xf32>
    %60 = arith.addf %56, %59 : vector<8x32xf32>
    %61 = math.tanh %60 : vector<8x32xf32>
    %62 = arith.subf %38, %61 : vector<8x32xf32>
    %63 = arith.mulf %55, %62 : vector<8x32xf32>
    %64 = arith.addf %61, %63 : vector<8x32xf32>
    %65 = arith.index_cast %42 : i32 to index
    %c0_23 = arith.constant 0 : index
    %66 = vector.load %arg7[%65, %c0_23] : memref<32x32xf32, #tpu.memory_space<vmem>>, vector<8x32xf32>
    tpu.vector_store %arg7[%65, %c0_23], %64 {strides = array<i32>} : memref<32x32xf32, #tpu.memory_space<vmem>>, vector<8x32xf32>,
    %c2_i32 = arith.constant 2 : i32
    %c8_i32_24 = arith.constant 8 : i32
    %67 = arith.muli %c2_i32, %c8_i32_24 : i32
    %68 = tpu.assume_multiple %67, 8 : i32
    %69 = arith.index_cast %68 : i32 to index
    %c0_25 = arith.constant 0 : index
    %70 = vector.load %arg10[%69, %c0_25] : memref<32x96xf32, #tpu.memory_space<vmem>>, vector<8x96xf32>
    %cst_26 = arith.constant dense<0.000000e+00> : vector<8x96xf32>
    %71 = tpu.matmul %64, %3, %cst_26 {dimension_numbers = #tpu.dot_dimension_numbers<[1], [0], [0], [1], [0, 0, 1, 1], [], []>} : vector<8x32xf32>, vector<32x96xf32>, vector<8x96xf32> -> vector<8x96xf32>
    %72 = vector.extract_strided_slice %70 {offsets = [0, 0], sizes = [8, 64], strides = [1, 1]} : vector<8x96xf32> to vector<8x64xf32>
    %73 = vector.extract_strided_slice %71 {offsets = [0, 0], sizes = [8, 64], strides = [1, 1]} : vector<8x96xf32> to vector<8x64xf32>
    %74 = arith.addf %72, %73 : vector<8x64xf32>
    %75 = arith.negf %74 : vector<8x64xf32>
    %76 = math.exp %75 : vector<8x64xf32>
    %cst_27 = arith.constant 1.000000e+00 : f32
    %77 = vector.broadcast %cst_27 : f32 to vector<8x64xf32>
    %78 = arith.addf %77, %76 : vector<8x64xf32>
    %79 = arith.divf %77, %78 : vector<8x64xf32>
    %80 = vector.extract_strided_slice %79 {offsets = [0, 0], sizes = [8, 32], strides = [1, 1]} : vector<8x64xf32> to vector<8x32xf32>
    %81 = vector.extract_strided_slice %79 {offsets = [0, 32], sizes = [8, 32], strides = [1, 1]} : vector<8x64xf32> to vector<8x32xf32>
    %82 = vector.extract_strided_slice %70 {offsets = [0, 64], sizes = [8, 32], strides = [1, 1]} : vector<8x96xf32> to vector<8x32xf32>
    %83 = vector.extract_strided_slice %71 {offsets = [0, 64], sizes = [8, 32], strides = [1, 1]} : vector<8x96xf32> to vector<8x32xf32>
    %84 = arith.addf %83, %13 : vector<8x32xf32>
    %85 = arith.mulf %80, %84 : vector<8x32xf32>
    %86 = arith.addf %82, %85 : vector<8x32xf32>
    %87 = math.tanh %86 : vector<8x32xf32>
    %88 = arith.subf %64, %87 : vector<8x32xf32>
    %89 = arith.mulf %81, %88 : vector<8x32xf32>
    %90 = arith.addf %87, %89 : vector<8x32xf32>
    %91 = arith.index_cast %68 : i32 to index
    %c0_28 = arith.constant 0 : index
    %92 = vector.load %arg7[%91, %c0_28] : memref<32x32xf32, #tpu.memory_space<vmem>>, vector<8x32xf32>
    tpu.vector_store %arg7[%91, %c0_28], %90 {strides = array<i32>} : memref<32x32xf32, #tpu.memory_space<vmem>>, vector<8x32xf32>,
    %c3_i32 = arith.constant 3 : i32
    %c8_i32_29 = arith.constant 8 : i32
    %93 = arith.muli %c3_i32, %c8_i32_29 : i32
    %94 = tpu.assume_multiple %93, 8 : i32
    %95 = arith.index_cast %94 : i32 to index
    %c0_30 = arith.constant 0 : index
    %96 = vector.load %arg10[%95, %c0_30] : memref<32x96xf32, #tpu.memory_space<vmem>>, vector<8x96xf32>
    %cst_31 = arith.constant dense<0.000000e+00> : vector<8x96xf32>
    %97 = tpu.matmul %90, %3, %cst_31 {dimension_numbers = #tpu.dot_dimension_numbers<[1], [0], [0], [1], [0, 0, 1, 1], [], []>} : vector<8x32xf32>, vector<32x96xf32>, vector<8x96xf32> -> vector<8x96xf32>
    %98 = vector.extract_strided_slice %96 {offsets = [0, 0], sizes = [8, 64], strides = [1, 1]} : vector<8x96xf32> to vector<8x64xf32>
    %99 = vector.extract_strided_slice %97 {offsets = [0, 0], sizes = [8, 64], strides = [1, 1]} : vector<8x96xf32> to vector<8x64xf32>
    %100 = arith.addf %98, %99 : vector<8x64xf32>
    %101 = arith.negf %100 : vector<8x64xf32>
    %102 = math.exp %101 : vector<8x64xf32>
    %cst_32 = arith.constant 1.000000e+00 : f32
    %103 = vector.broadcast %cst_32 : f32 to vector<8x64xf32>
    %104 = arith.addf %103, %102 : vector<8x64xf32>
    %105 = arith.divf %103, %104 : vector<8x64xf32>
    %106 = vector.extract_strided_slice %105 {offsets = [0, 0], sizes = [8, 32], strides = [1, 1]} : vector<8x64xf32> to vector<8x32xf32>
    %107 = vector.extract_strided_slice %105 {offsets = [0, 32], sizes = [8, 32], strides = [1, 1]} : vector<8x64xf32> to vector<8x32xf32>
    %108 = vector.extract_strided_slice %96 {offsets = [0, 64], sizes = [8, 32], strides = [1, 1]} : vector<8x96xf32> to vector<8x32xf32>
    %109 = vector.extract_strided_slice %97 {offsets = [0, 64], sizes = [8, 32], strides = [1, 1]} : vector<8x96xf32> to vector<8x32xf32>
    %110 = arith.addf %109, %13 : vector<8x32xf32>
    %111 = arith.mulf %106, %110 : vector<8x32xf32>
    %112 = arith.addf %108, %111 : vector<8x32xf32>
    %113 = math.tanh %112 : vector<8x32xf32>
    %114 = arith.subf %90, %113 : vector<8x32xf32>
    %115 = arith.mulf %107, %114 : vector<8x32xf32>
    %116 = arith.addf %113, %115 : vector<8x32xf32>
    %117 = arith.index_cast %94 : i32 to index
    %c0_33 = arith.constant 0 : index
    %118 = vector.load %arg7[%117, %c0_33] : memref<32x32xf32, #tpu.memory_space<vmem>>, vector<8x32xf32>
    tpu.vector_store %arg7[%117, %c0_33], %116 {strides = array<i32>} : memref<32x32xf32, #tpu.memory_space<vmem>>, vector<8x32xf32>,
    %c4_i32 = arith.constant 4 : i32
    %c0_34 = arith.constant 0 : index
    %c0_35 = arith.constant 0 : index
    %119 = vector.load %arg9[%c0_34, %c0_35] : memref<8x32xf32, #tpu.memory_space<vmem>>, vector<8x32xf32>
    tpu.vector_store %arg9[%c0_34, %c0_35], %116 {strides = array<i32>} : memref<8x32xf32, #tpu.memory_space<vmem>>, vector<8x32xf32>,
    %c1_i32_36 = arith.constant 1 : i32
    %120 = arith.cmpi eq, %arg0, %c1_i32_36 : i32
    %121 = arith.extui %120 : i1 to i32
    %c0_i32_37 = arith.constant 0 : i32
    %122 = arith.cmpi ne, %121, %c0_i32_37 : i32
    scf.if %122 {
      %c0_38 = arith.constant 0 : index
      %c0_39 = arith.constant 0 : index
      %c0_40 = arith.constant 0 : index
      %123 = vector.load %arg8[%c0_38, %c0_39, %c0_40] : memref<1x8x32xf32, #tpu.memory_space<vmem>>, vector<1x8x32xf32>
      %124 = vector.shape_cast %123 : vector<1x8x32xf32> to vector<8x32xf32>
      %125 = vector.shape_cast %116 : vector<8x32xf32> to vector<1x8x32xf32>
      tpu.vector_store %arg8[%c0_38, %c0_39, %c0_40], %125 {strides = array<i32>} : memref<1x8x32xf32, #tpu.memory_space<vmem>>, vector<1x8x32xf32>,
    } else {
    }
    return
  }
  func.func @transform_0(%arg0: i32) -> (i32, i32, i32) {
    %c0_i32 = arith.constant 0 : i32
    %c0_i32_0 = arith.constant 0 : i32
    %c0_i32_1 = arith.constant 0 : i32
    %c0_i32_2 = arith.constant 0 : i32
    return %c0_i32, %c0_i32_0, %c0_i32_1 : i32, i32, i32
  }
  func.func @transform_1(%arg0: i32) -> (i32, i32) {
    %c0_i32 = arith.constant 0 : i32
    %c0_i32_0 = arith.constant 0 : i32
    return %arg0, %c0_i32 : i32, i32
  }
  func.func @transform_2(%arg0: i32) -> (i32, i32) {
    %c0_i32 = arith.constant 0 : i32
    %c0_i32_0 = arith.constant 0 : i32
    %c0_i32_1 = arith.constant 0 : i32
    return %c0_i32, %c0_i32_0 : i32, i32
  }
  func.func @transform_3(%arg0: i32) -> (i32, i32) {
    %c0_i32 = arith.constant 0 : i32
    %c0_i32_0 = arith.constant 0 : i32
    %c0_i32_1 = arith.constant 0 : i32
    return %c0_i32, %c0_i32_0 : i32, i32
  }
  func.func @transform_4(%arg0: i32) -> (i32, i32) {
    %c0_i32 = arith.constant 0 : i32
    %c0_i32_0 = arith.constant 0 : i32
    %c0_i32_1 = arith.constant 0 : i32
    return %c0_i32, %c0_i32_0 : i32, i32
  }
  func.func @transform_5(%arg0: i32) -> (i32, i32) {
    %c0_i32 = arith.constant 0 : i32
    %c0_i32_0 = arith.constant 0 : i32
    %c0_i32_1 = arith.constant 0 : i32
    return %c0_i32, %c0_i32_0 : i32, i32
  }
  func.func @transform_6(%arg0: i32) -> (i32, i32) {
    %c0_i32 = arith.constant 0 : i32
    %c0_i32_0 = arith.constant 0 : i32
    return %arg0, %c0_i32 : i32, i32
  }
  func.func @transform_7(%arg0: i32) -> (i32, i32, i32) {
    %c0_i32 = arith.constant 0 : i32
    %c0_i32_0 = arith.constant 0 : i32
    %c0_i32_1 = arith.constant 0 : i32
    %c0_i32_2 = arith.constant 0 : i32
    return %c0_i32, %c0_i32_0, %c0_i32_1 : i32, i32, i32
  }
}

</mosaic_0001>

<llo_original>
// kernel: tpu_custom_call.1
$region0: #{tpu_custom_call.1}
  #allocation0 [shape = 'u32[]', space=smem, size = 0x4, offset = 0x4, fixed_abs, tag = 'smem constant byte address 0x4 - core index']
  #allocation1 [shape = 'u32[144,128]{1,0:T(1,128)}', space=vmem, size = 0x12000, scoped, tag = 'internal scratch']
  #allocation2 [shape = 'f32[8,32]{1,0:T(8,128)}', space=vmem, size = 0x1000, scoped, tag = 'scratch operand']
  #allocation3 [shape = 'f32[32,96]{1,0:T(8,128)}', space=vmem, size = 0x4000, scoped, tag = 'scratch operand']
  %s0 = inlined_call_operand.vmem [shape: f32[1,8,32], index: 0, kind: input, shape index: {}]
  %s1 = inlined_call_operand.vmem [shape: f32[64,32], index: 1, kind: input, shape index: {}]
  %s2 = inlined_call_operand.vmem [shape: f32[32,96], index: 2, kind: input, shape index: {}]
  %s3 = inlined_call_operand.vmem [shape: f32[32,96], index: 3, kind: input, shape index: {}]
  %s4 = inlined_call_operand.vmem [shape: f32[1,96], index: 4, kind: input, shape index: {}]
  %s5 = inlined_call_operand.vmem [shape: f32[1,32], index: 5, kind: input, shape index: {}]
  %s6 = inlined_call_operand.vmem [shape: f32[64,32], index: 6, kind: output, shape index: {0}]
  %s7 = inlined_call_operand.hbm [shape: f32[1,8,32], index: 7, kind: output, shape index: {1}]
  %8 = xla_tuple %s6, %s7
  %s9 = sld [smem:[#allocation0]]
  $region73: #{tpu_custom_call.1} parent=0
    _
  %s11 = ssub.s32 1, %s9
  %s12 = scalar_select 0, %s11, %s9
  $region1: #{tpu_custom_call.1} parent=0
    #allocation4 [shape = 'u8[4096]{0}', space=vmem, size = 0x1000, scoped, tag = 'output window, operand 1, single buffered']
    #allocation5 [shape = 's32[2]{0}', space=sflag, size = 0x8, scoped, tag = 'scoped memory for tpu_custom_call.1']
    %13 = vsyncpa [#allocation5], 0
    loop: start=0, step=1, limit=4
    $region2: #{tpu_custom_call.1} parent=1 // loop_pre_header
      _
    $region3: #{tpu_custom_call.1} parent=1 // loop_header
      %s15 = sphi 0, %s19
      %p16 = scmp.ge.s32.totalorder %s15, 4
      %s23 = sphi 0, %s23
      %s25 = sphi 0, %s23
      %s26 = sphi 0, %s25
      %s40 = sphi 0, %s26
      %s46 = sphi 0, %s48
      %s49 = sphi 0, %s46
      %s50 = sphi 0, %s49
      %s66 = sphi 0, %s50
      %s70 = sphi 0, %s70
      %s72 = sphi 0, %s70
      %s73 = sphi 0, %s72
      %s87 = sphi 0, %s73
      %s91 = sphi 0, %s91
      %s93 = sphi 0, %s91
      %s94 = sphi 0, %s93
      %s108 = sphi 0, %s94
      %s112 = sphi 0, %s112
      %s114 = sphi 0, %s112
      %s115 = sphi 0, %s114
      %s129 = sphi 0, %s115
      %s133 = sphi 0, %s133
      %s135 = sphi 0, %s133
      %s136 = sphi 0, %s135
      %s150 = sphi 0, %s136
      %s156 = sphi 0, %s158
      %s159 = sphi 0, %s156
      %s160 = sphi 0, %s159
      %s176 = sphi 0, %s160
      %s180 = sphi 0, %s180
      %s182 = sphi 0, %s180
      %s183 = sphi 0, %s182
      %s197 = sphi 0, %s183
    $region4: #{tpu_custom_call.1} parent=1 // loop_header_branch
      %18 = sbr.rel (%p16) target = $region8
    $region5: #{tpu_custom_call.1} parent=1 // loop_body
      %s20 = ssub.s32 %s15, 1
      %s21 = ssub.s32 %s15, 2
      %s22 = sadd.s32 %s15, 1
      %s24 = sadd.s32 %s23, 1
      %p27 = scmp.eq.s32.totalorder %s15, 1
      %p28 = scmp.ne.s32.totalorder %s23, %s25
      %p29 = scmp.eq.s32.totalorder %s15, 0
      %p30 = por %p28, %p29
      %p31 = scmp.ne.s32.totalorder %s23, %s25
      %p32 = scmp.eq.s32.totalorder %s20, 1
      %p33 = por %p31, %p32
      %p34 = scmp.ne.s32.totalorder %s25, %s26
      %p35 = scmp.eq.s32.totalorder %s20, 0
      %p36 = por %p34, %p35
      %p37 = scmp.ne.s32.totalorder %s25, %s26
      %p38 = scmp.eq.s32.totalorder %s21, 1
      %p39 = por %p37, %p38
      %p41 = scmp.ne.s32.totalorder %s26, %s40
      %p42 = scmp.eq.s32.totalorder %s21, 0
      %p43 = por %p41, %p42
      %s44 = ssub.s32 %s15, %s22
      %p45 = scmp.eq.s32.totalorder %s44, 0
      %s47 = sadd.s32 %s46, 1
      %s48 = scalar_select %p45, %s46, %s47
      %p51 = pneg %p45
      %p52 = scmp.eq.s32.totalorder %s15, 1
      %p53 = por %p51, %p52
      %p54 = scmp.ne.s32.totalorder %s46, %s49
      %p55 = scmp.eq.s32.totalorder %s15, 0
      %p56 = por %p54, %p55
      %p57 = scmp.ne.s32.totalorder %s46, %s49
      %p58 = scmp.eq.s32.totalorder %s20, 1
      %p59 = por %p57, %p58
      %p60 = scmp.ne.s32.totalorder %s49, %s50
      %p61 = scmp.eq.s32.totalorder %s20, 0
      %p62 = por %p60, %p61
      %p63 = scmp.ne.s32.totalorder %s49, %s50
      %p64 = scmp.eq.s32.totalorder %s21, 1
      %p65 = por %p63, %p64
      %p67 = scmp.ne.s32.totalorder %s50, %s66
      %p68 = scmp.eq.s32.totalorder %s21, 0
      %p69 = por %p67, %p68
      %s71 = sadd.s32 %s70, 1
      %p74 = scmp.eq.s32.totalorder %s15, 1
      %p75 = scmp.ne.s32.totalorder %s70, %s72
      %p76 = scmp.eq.s32.totalorder %s15, 0
      %p77 = por %p75, %p76
      %p78 = scmp.ne.s32.totalorder %s70, %s72
      %p79 = scmp.eq.s32.totalorder %s20, 1
      %p80 = por %p78, %p79
      %p81 = scmp.ne.s32.totalorder %s72, %s73
      %p82 = scmp.eq.s32.totalorder %s20, 0
      %p83 = por %p81, %p82
      %p84 = scmp.ne.s32.totalorder %s72, %s73
      %p85 = scmp.eq.s32.totalorder %s21, 1
      %p86 = por %p84, %p85
      %p88 = scmp.ne.s32.totalorder %s73, %s87
      %p89 = scmp.eq.s32.totalorder %s21, 0
      %p90 = por %p88, %p89
      %s92 = sadd.s32 %s91, 1
      %p95 = scmp.eq.s32.totalorder %s15, 1
      %p96 = scmp.ne.s32.totalorder %s91, %s93
      %p97 = scmp.eq.s32.totalorder %s15, 0
      %p98 = por %p96, %p97
      %p99 = scmp.ne.s32.totalorder %s91, %s93
      %p100 = scmp.eq.s32.totalorder %s20, 1
      %p101 = por %p99, %p100
      %p102 = scmp.ne.s32.totalorder %s93, %s94
      %p103 = scmp.eq.s32.totalorder %s20, 0
      %p104 = por %p102, %p103
      %p105 = scmp.ne.s32.totalorder %s93, %s94
      %p106 = scmp.eq.s32.totalorder %s21, 1
      %p107 = por %p105, %p106
      %p109 = scmp.ne.s32.totalorder %s94, %s108
      %p110 = scmp.eq.s32.totalorder %s21, 0
      %p111 = por %p109, %p110
      %s113 = sadd.s32 %s112, 1
      %p116 = scmp.eq.s32.totalorder %s15, 1
      %p117 = scmp.ne.s32.totalorder %s112, %s114
      %p118 = scmp.eq.s32.totalorder %s15, 0
      %p119 = por %p117, %p118
      %p120 = scmp.ne.s32.totalorder %s112, %s114
      %p121 = scmp.eq.s32.totalorder %s20, 1
      %p122 = por %p120, %p121
      %p123 = scmp.ne.s32.totalorder %s114, %s115
      %p124 = scmp.eq.s32.totalorder %s20, 0
      %p125 = por %p123, %p124
      %p126 = scmp.ne.s32.totalorder %s114, %s115
      %p127 = scmp.eq.s32.totalorder %s21, 1
      %p128 = por %p126, %p127
      %p130 = scmp.ne.s32.totalorder %s115, %s129
      %p131 = scmp.eq.s32.totalorder %s21, 0
      %p132 = por %p130, %p131
      %s134 = sadd.s32 %s133, 1
      %p137 = scmp.eq.s32.totalorder %s15, 1
      %p138 = scmp.ne.s32.totalorder %s133, %s135
      %p139 = scmp.eq.s32.totalorder %s15, 0
      %p140 = por %p138, %p139
      %p141 = scmp.ne.s32.totalorder %s133, %s135
      %p142 = scmp.eq.s32.totalorder %s20, 1
      %p143 = por %p141, %p142
      %p144 = scmp.ne.s32.totalorder %s135, %s136
      %p145 = scmp.eq.s32.totalorder %s20, 0
      %p146 = por %p144, %p145
      %p147 = scmp.ne.s32.totalorder %s135, %s136
      %p148 = scmp.eq.s32.totalorder %s21, 1
      %p149 = por %p147, %p148
      %p151 = scmp.ne.s32.totalorder %s136, %s150
      %p152 = scmp.eq.s32.totalorder %s21, 0
      %p153 = por %p151, %p152
      %s154 = ssub.s32 %s15, %s22
      %p155 = scmp.eq.s32.totalorder %s154, 0
      %s157 = sadd.s32 %s156, 1
      %s158 = scalar_select %p155, %s156, %s157
      %p161 = pneg %p155
      %p162 = scmp.eq.s32.totalorder %s15, 1
      %p163 = por %p161, %p162
      %p164 = scmp.ne.s32.totalorder %s156, %s159
      %p165 = scmp.eq.s32.totalorder %s15, 0
      %p166 = por %p164, %p165
      %p167 = scmp.ne.s32.totalorder %s156, %s159
      %p168 = scmp.eq.s32.totalorder %s20, 1
      %p169 = por %p167, %p168
      %p170 = scmp.ne.s32.totalorder %s159, %s160
      %p171 = scmp.eq.s32.totalorder %s20, 0
      %p172 = por %p170, %p171
      %p173 = scmp.ne.s32.totalorder %s159, %s160
      %p174 = scmp.eq.s32.totalorder %s21, 1
      %p175 = por %p173, %p174
      %p177 = scmp.ne.s32.totalorder %s160, %s176
      %p178 = scmp.eq.s32.totalorder %s21, 0
      %p179 = por %p177, %p178
      %s181 = sadd.s32 %s180, 1
      %p184 = scmp.eq.s32.totalorder %s15, 1
      %p185 = scmp.ne.s32.totalorder %s180, %s182
      %p186 = scmp.eq.s32.totalorder %s15, 0
      %p187 = por %p185, %p186
      %p188 = scmp.ne.s32.totalorder %s180, %s182
      %p189 = scmp.eq.s32.totalorder %s20, 1
      %p190 = por %p188, %p189
      %p191 = scmp.ne.s32.totalorder %s182, %s183
      %p192 = scmp.eq.s32.totalorder %s20, 0
      %p193 = por %p191, %p192
      %p194 = scmp.ne.s32.totalorder %s182, %s183
      %p195 = scmp.eq.s32.totalorder %s21, 1
      %p196 = por %p194, %p195
      %p198 = scmp.ne.s32.totalorder %s183, %s197
      %p199 = scmp.eq.s32.totalorder %s21, 0
      %p200 = por %p198, %p199
      %p201 = scmp.le.s32.totalorder 1, %s15
      %p202 = scmp.lt.s32.totalorder %s15, 3
      %p203 = pnand %p201, %p202
      %p204 = pneg %p203
      // Predicated region
      $region9: #{tpu_custom_call.1} parent=5 // pred_check
        _
      $region10: #{tpu_custom_call.1} parent=5 // pred_check_branch
        %206 = sbr.rel (%p203) target = $region12
      $region11: #{tpu_custom_call.1} parent=5 // pred_region
        %s207 = ssub.s32 %s15, 1
        // Predicated region
        $region13: #{tpu_custom_call.1} parent=11 // pred_check
          %p208 = pneg %p36
        $region14: #{tpu_custom_call.1} parent=11 // pred_check_branch
          %210 = sbr.rel (%p208) target = $region16
        $region15: #{tpu_custom_call.1} parent=11 // pred_region
          _
        $region16: #{tpu_custom_call.1} parent=11 // pred_fallthru
          _
        // Predicated region
        $region17: #{tpu_custom_call.1} parent=11 // pred_check
          %p211 = pneg %p83
        $region18: #{tpu_custom_call.1} parent=11 // pred_check_branch
          %213 = sbr.rel (%p211) target = $region20
        $region19: #{tpu_custom_call.1} parent=11 // pred_region
          _
        $region20: #{tpu_custom_call.1} parent=11 // pred_fallthru
          _
        // Predicated region
        $region21: #{tpu_custom_call.1} parent=11 // pred_check
          %p214 = pneg %p104
        $region22: #{tpu_custom_call.1} parent=11 // pred_check_branch
          %216 = sbr.rel (%p214) target = $region24
        $region23: #{tpu_custom_call.1} parent=11 // pred_region
          _
        $region24: #{tpu_custom_call.1} parent=11 // pred_fallthru
          _
        // Predicated region
        $region25: #{tpu_custom_call.1} parent=11 // pred_check
          %p217 = pneg %p125
        $region26: #{tpu_custom_call.1} parent=11 // pred_check_branch
          %219 = sbr.rel (%p217) target = $region28
        $region27: #{tpu_custom_call.1} parent=11 // pred_region
          _
        $region28: #{tpu_custom_call.1} parent=11 // pred_fallthru
          _
        // Predicated region
        $region29: #{tpu_custom_call.1} parent=11 // pred_check
          %p220 = pneg %p146
        $region30: #{tpu_custom_call.1} parent=11 // pred_check_branch
          %222 = sbr.rel (%p220) target = $region32
        $region31: #{tpu_custom_call.1} parent=11 // pred_region
          _
        $region32: #{tpu_custom_call.1} parent=11 // pred_fallthru
          _
      $region12: #{tpu_custom_call.1} parent=5 // pred_fallthru
        _
      %p223 = scmp.lt.s32.totalorder %s15, 2
      // Predicated region
      $region33: #{tpu_custom_call.1} parent=5 // pred_check
        %p224 = pneg %p223
      $region34: #{tpu_custom_call.1} parent=5 // pred_check_branch
        %226 = sbr.rel (%p224) target = $region36
      $region35: #{tpu_custom_call.1} parent=5 // pred_region
        // Predicated region
        $region37: #{tpu_custom_call.1} parent=35 // pred_check
          %p227 = pneg %p56
        $region38: #{tpu_custom_call.1} parent=35 // pred_check_branch
          %229 = sbr.rel (%p227) target = $region40
        $region39: #{tpu_custom_call.1} parent=35 // pred_region
          %s230 = smul.u32 4, %s15
          %p231 = scmp.lt.s32.totalorder %s230, 7
          %s232 = scalar_select %p231, %s230, 7
          %s233 = smul.addr %s232, 8
          %s234 = scalar_lea.vmem %s1, %s233
          %s235 = smul.u32 4, %s15
        $region40: #{tpu_custom_call.1} parent=35 // pred_fallthru
          _
      $region36: #{tpu_custom_call.1} parent=5 // pred_fallthru
        _
      %p236 = scmp.le.s32.totalorder 1, %s15
      %p237 = scmp.lt.s32.totalorder %s15, 3
      %p238 = pnand %p236, %p237
      %p239 = pneg %p238
      // Predicated region
      $region41: #{tpu_custom_call.1} parent=5 // pred_check
        _
      $region42: #{tpu_custom_call.1} parent=5 // pred_check_branch
        %241 = sbr.rel (%p238) target = $region44
      $region43: #{tpu_custom_call.1} parent=5 // pred_region
        %s242 = ssub.s32 %s15, 1
        %p243 = pneg %p36
        %p244 = pneg %p33
        %s245 = smul.u32 4, %s20
        %p246 = scmp.lt.s32.totalorder %s245, 7
        %s247 = scalar_select %p246, %s245, 7
        %s248 = smul.addr %s247, 8
        %s249 = scalar_lea.vmem %s1, %s248
        %p250 = pneg %p62
        %p251 = pneg %p59
        %p252 = pneg %p83
        %p253 = pneg %p80
        %p254 = pneg %p104
        %p255 = pneg %p101
        %p256 = pneg %p125
        %p257 = pneg %p122
        %p258 = pneg %p146
        %p259 = pneg %p143
        %p260 = pneg %p172
        %p261 = pneg %p169
        %s262 = smul.u32 4, %s20
        %p263 = scmp.lt.s32.totalorder %s262, 7
        %s264 = scalar_select %p263, %s262, 7
        %s265 = smul.addr %s264, 8
        %s266 = scalar_lea.vmem %s6, %s265
        %p267 = pneg %p193
        %p268 = pneg %p190
        %s269 = smul.u32 4, %s20
        %p270 = scmp.lt.s32.totalorder %s269, 7
        %s271 = scalar_select %p270, %s269, 7
        %s272 = smul.addr %s271, 8
        %s273 = scalar_lea.vmem %s1, %s272
        %s274 = smul.u32 4, %s20
        %s275 = smul.u32 4, %s20
        %p276 = scmp.lt.s32.totalorder %s275, 7
        %s277 = scalar_select %p276, %s275, 7
        %s278 = smul.addr %s277, 8
        %s279 = scalar_lea.vmem %s6, %s278
        %s280 = smul.u32 4, %s20
        %p281 = scmp.eq.s32.totalorder %s20, 0
        // Predicated region
        $region45: #{tpu_custom_call.1} parent=43 // pred_check
          %p282 = pneg %p281
        $region46: #{tpu_custom_call.1} parent=43 // pred_check_branch
          %284 = sbr.rel (%p282) target = $region48
        $region47: #{tpu_custom_call.1} parent=43 // pred_region
          %v285 = vld [vmem:[%s0] sm:$0xff]
          %vm286 = vcmask 261120
          %287 = vst.msk [vmem:[#allocation2] sm:$0xff] %vm286, %v285
        $region48: #{tpu_custom_call.1} parent=43 // pred_fallthru
          _
        %v288 = vld [vmem:[%s3] sm:$0xff]
        %v289 = vld [vmem:[%s3 + $0x8] sm:$0xff]
        %v290 = vld [vmem:[%s3 + $0x10] sm:$0xff]
        %v291 = vld [vmem:[%s3 + $0x18] sm:$0xff]
        %v292 = vld [vmem:[%s273] sm:$0xff]
        %v293 = vld [vmem:[%s273 + $0x8] sm:$0xff]
        %v294 = vld [vmem:[%s273 + $0x10] sm:$0xff]
        %v295 = vld [vmem:[%s273 + $0x18] sm:$0xff]
        %v296 = vld [vmem:[%s2] sm:$0xff]
        %v297 = vld [vmem:[%s2 + $0x8] sm:$0xff]
        %v298 = vld [vmem:[%s2 + $0x10] sm:$0xff]
        %v299 = vld [vmem:[%s2 + $0x18] sm:$0xff]
        %v300 = vld [vmem:[%s4] sm:$0x1]
        %v302 = vlaneseq
        %v303 = vshrl.u32 %v302, 7
        %v304 = vsub.s32 0, %v303
        %v305 = vrot.slane %v300, %v304
        %vm307 = vcmask 261120
        %v309 = vsel %vm307, %v292, 0
        %v312 = vsel %vm307, %v293, 0
        %v315 = vsel %vm307, %v294, 0
        %v318 = vsel %vm307, %v295, 0
        %320 = vmatprep.subr.mxu0 0.0
        %321 = vmatpush1.msra.mxu0 %v296
        %322 = vmatprep.subr.mxu0 0.0
        %323 = vmatpush1.msra.mxu0 %v297
        %324 = vmatprep.subr.mxu0 0.0
        %325 = vmatpush1.msra.mxu0 %v298
        %326 = vmatprep.subr.mxu0 0.0
        %327 = vmatpush1.msra.mxu0 %v299
        %328 = vmatprep.subr.mxu0 0.0
        %329 = vmatpush1.msra.mxu0 0.0
        %330 = vmatprep.subr.mxu0 0.0
        %331 = vmatpush1.msra.mxu0 0.0
        %332 = vmatprep.subr.mxu0 0.0
        %333 = vmatpush1.msra.mxu0 0.0
        %334 = vmatprep.subr.mxu0 0.0
        %335 = vmatpush1.msra.mxu0 0.0
        %336 = vmatprep.subr.mxu0 0.0
        %337 = vmatpush1.msra.mxu0 0.0
        %338 = vmatprep.subr.mxu0 0.0
        %339 = vmatpush1.msra.mxu0 0.0
        %340 = vmatprep.subr.mxu0 0.0
        %341 = vmatpush1.msra.mxu0 0.0
        %342 = vmatprep.subr.mxu0 0.0
        %343 = vmatpush1.msra.mxu0 0.0
        %344 = vmatprep.subr.mxu0 0.0
        %345 = vmatpush1.msra.mxu0 0.0
        %346 = vmatprep.subr.mxu0 0.0
        %347 = vmatpush1.msra.mxu0 0.0
        %348 = vmatprep.subr.mxu0 0.0
        %349 = vmatpush1.msra.mxu0 0.0
        %350 = vmatprep.subr.mxu0 0.0
        %351 = vmatpush1.msra.mxu0 0.0
        %352 = vmatprep.subr.mxu0 0.0
        %353 = vmatpush1.msra.mxu0 0.0
        %354 = vmatprep.subr.mxu0 0.0
        %355 = vmatpush1.msra.mxu0 0.0
        %356 = vmatprep.subr.mxu0 0.0
        %357 = vmatpush1.msra.mxu0 0.0
        %358 = vmatprep.subr.mxu0 0.0
        %359 = vmatpush1.msra.mxu0 0.0
        %360 = vmatprep.subr.mxu0 0.0
        %361 = vmatpush1.msra.mxu0 0.0
        %362 = vmatprep.subr.mxu0 0.0
        %363 = vmatpush1.msra.mxu0 0.0
        %364 = vmatprep.subr.mxu0 0.0
        %365 = vmatpush1.msra.mxu0 0.0
        %366 = vmatprep.subr.mxu0 0.0
        %367 = vmatpush1.msra.mxu0 0.0
        %368 = vmatprep.subr.mxu0 0.0
        %369 = vmatpush1.msra.mxu0 0.0
        %370 = vmatprep.subr.mxu0 0.0
        %371 = vmatpush1.msra.mxu0 0.0
        %372 = vmatprep.subr.mxu0 0.0
        %373 = vmatpush1.msra.mxu0 0.0
        %374 = vmatprep.subr.mxu0 0.0
        %375 = vmatpush1.msra.mxu0 0.0
        %376 = vmatprep.subr.mxu0 0.0
        %377 = vmatpush1.msra.mxu0 0.0
        %378 = vmatprep.subr.mxu0 0.0
        %379 = vmatpush1.msra.mxu0 0.0
        %380 = vmatprep.subr.mxu0 0.0
        %381 = vmatpush1.msra.mxu0 0.0
        %382 = vmatprep.subr.mxu0 0.0
        %383 = vmatpush1.msra.mxu0 0.0
        %384 = vmatprep.mubr.f32.mxu0 0.0
        %385 = vmatmul.mubr.f32.gmra.mrb[0].mxu0 %v309
        %v386 = vpop.f32.mrb[0].mxu0
        %v387 = vadd.f32 %v305, %v386
        %v388 = vpop.f32.mrb[0].mxu0
        %389 = vmatprep.mubr.f32.mxu0 0.0
        %390 = vmatmul.mubr.f32.gmra.mrb[0].mxu0 %v312
        %v391 = vpop.f32.mrb[0].mxu0
        %v392 = vadd.f32 %v305, %v391
        %v393 = vpop.f32.mrb[0].mxu0
        %394 = vmatprep.mubr.f32.mxu0 0.0
        %395 = vmatmul.mubr.f32.gmra.mrb[0].mxu0 %v315
        %v396 = vpop.f32.mrb[0].mxu0
        %v397 = vadd.f32 %v305, %v396
        %v398 = vpop.f32.mrb[0].mxu0
        %399 = vmatprep.mubr.f32.mxu0 0.0
        %400 = vmatmul.mubr.f32.gmra.mrb[0].mxu0 %v318
        %v401 = vpop.f32.mrb[0].mxu0
        %v402 = vadd.f32 %v305, %v401
        %v403 = vpop.f32.mrb[0].mxu0
        %404 = vdwg.mxu0
        %vm405 = vcmask 785408
        %406 = vst.msk [vmem:[#allocation3] sm:$0xff] %vm405, %v387
        %407 = vst.msk [vmem:[#allocation3 + $0x8] sm:$0xff] %vm405, %v392
        %408 = vst.msk [vmem:[#allocation3 + $0x10] sm:$0xff] %vm405, %v397
        %409 = vst.msk [vmem:[#allocation3 + $0x18] sm:$0xff] %vm405, %v402
        %v410 = vld [vmem:[%s5] sm:$0x1]
        %v412 = vlaneseq
        %v413 = vshrl.u32 %v412, 7
        %v414 = vsub.s32 0, %v413
        %v415 = vrot.slane %v410, %v414
        %v416 = vld [vmem:[#allocation2] sm:$0xff]
        %v417 = vld [vmem:[#allocation3] sm:$0xff]
        %v419 = vsel %vm307, %v416, 0
        %421 = vmatprep.subr.mxu0 0.0
        %422 = vmatpush1.msra.mxu0 %v288
        %423 = vmatprep.subr.mxu0 0.0
        %424 = vmatpush1.msra.mxu0 %v289
        %425 = vmatprep.subr.mxu0 0.0
        %426 = vmatpush1.msra.mxu0 %v290
        %427 = vmatprep.subr.mxu0 0.0
        %428 = vmatpush1.msra.mxu0 %v291
        %429 = vmatprep.subr.mxu0 0.0
        %430 = vmatpush1.msra.mxu0 0.0
        %431 = vmatprep.subr.mxu0 0.0
        %432 = vmatpush1.msra.mxu0 0.0
        %433 = vmatprep.subr.mxu0 0.0
        %434 = vmatpush1.msra.mxu0 0.0
        %435 = vmatprep.subr.mxu0 0.0
        %436 = vmatpush1.msra.mxu0 0.0
        %437 = vmatprep.subr.mxu0 0.0
        %438 = vmatpush1.msra.mxu0 0.0
        %439 = vmatprep.subr.mxu0 0.0
        %440 = vmatpush1.msra.mxu0 0.0
        %441 = vmatprep.subr.mxu0 0.0
        %442 = vmatpush1.msra.mxu0 0.0
        %443 = vmatprep.subr.mxu0 0.0
        %444 = vmatpush1.msra.mxu0 0.0
        %445 = vmatprep.subr.mxu0 0.0
        %446 = vmatpush1.msra.mxu0 0.0
        %447 = vmatprep.subr.mxu0 0.0
        %448 = vmatpush1.msra.mxu0 0.0
        %449 = vmatprep.subr.mxu0 0.0
        %450 = vmatpush1.msra.mxu0 0.0
        %451 = vmatprep.subr.mxu0 0.0
        %452 = vmatpush1.msra.mxu0 0.0
        %453 = vmatprep.subr.mxu0 0.0
        %454 = vmatpush1.msra.mxu0 0.0
        %455 = vmatprep.subr.mxu0 0.0
        %456 = vmatpush1.msra.mxu0 0.0
        %457 = vmatprep.subr.mxu0 0.0
        %458 = vmatpush1.msra.mxu0 0.0
        %459 = vmatprep.subr.mxu0 0.0
        %460 = vmatpush1.msra.mxu0 0.0
        %461 = vmatprep.subr.mxu0 0.0
        %462 = vmatpush1.msra.mxu0 0.0
        %463 = vmatprep.subr.mxu0 0.0
        %464 = vmatpush1.msra.mxu0 0.0
        %465 = vmatprep.subr.mxu0 0.0
        %466 = vmatpush1.msra.mxu0 0.0
        %467 = vmatprep.subr.mxu0 0.0
        %468 = vmatpush1.msra.mxu0 0.0
        %469 = vmatprep.subr.mxu0 0.0
        %470 = vmatpush1.msra.mxu0 0.0
        %471 = vmatprep.subr.mxu0 0.0
        %472 = vmatpush1.msra.mxu0 0.0
        %473 = vmatprep.subr.mxu0 0.0
        %474 = vmatpush1.msra.mxu0 0.0
        %475 = vmatprep.subr.mxu0 0.0
        %476 = vmatpush1.msra.mxu0 0.0
        %477 = vmatprep.subr.mxu0 0.0
        %478 = vmatpush1.msra.mxu0 0.0
        %479 = vmatprep.subr.mxu0 0.0
        %480 = vmatpush1.msra.mxu0 0.0
        %481 = vmatprep.subr.mxu0 0.0
        %482 = vmatpush1.msra.mxu0 0.0
        %483 = vmatprep.subr.mxu0 0.0
        %484 = vmatpush1.msra.mxu0 0.0
        %485 = vmatprep.mubr.f32.mxu0 0.0
        %486 = vmatmul.mubr.f32.gmra.mrb[0].mxu0 %v419
        %v487 = vpop.f32.mrb[0].mxu0
        %v488 = vadd.f32 0.0, %v487
        %v489 = vpop.f32.mrb[0].mxu0
        %490 = vdwg.mxu0
        %v491 = vadd.f32 %v417, %v488
        %v492 = vxor.u32 %v491, 2147483648
        %v493 = vmul.f32 %v492, 1.442695
        %v494 = vpow.pop %v493
        %v495 = vadd.f32 %v494, 1.0
        %v496 = vrcp.pop %v495
        %v497 = vmul.f32 1.0, %v496
        %498 = vrot.lane.b32.xlu0 %v415, 64
        %v499 = vpop.permute.xlu0 %498
        %v501 = vadd.f32 %v488, %v499
        %503 = vrot.lane.b32.xlu0 %v501, 64
        %v504 = vpop.permute.xlu0 %503
        %v506 = vmul.f32 %v497, %v504
        %508 = vrot.lane.b32.xlu0 %v506, 64
        %v509 = vpop.permute.xlu0 %508
        %v511 = vadd.f32 %v417, %v509
        %v512 = vtanh.pop %v511
        %514 = vrot.lane.b32.xlu0 %v512, 64
        %v515 = vpop.permute.xlu0 %514
        %v517 = vsub.f32 %v416, %v515
        %519 = vrot.lane.b32.xlu0 %v517, 32
        %v520 = vpop.permute.xlu0 %519
        %v522 = vmul.f32 %v497, %v520
        %524 = vrot.lane.b32.xlu0 %v522, 32
        %v525 = vpop.permute.xlu0 %524
        %v527 = vadd.f32 %v512, %v525
        %529 = vrot.lane.b32.xlu0 %v527, 64
        %v530 = vpop.permute.xlu0 %529
        %532 = vst.msk [vmem:[%s279] sm:$0xff] %vm307, %v530
        %s533 = scalar_lea.vmem [#allocation3], 8
        %v534 = vld [vmem:[%s533] sm:$0xff]
        %v535 = vsel %vm307, %v530, 0
        %537 = vmatprep.subr.mxu0 0.0
        %538 = vmatpush1.msra.mxu0 %v288
        %539 = vmatprep.subr.mxu0 0.0
        %540 = vmatpush1.msra.mxu0 %v289
        %541 = vmatprep.subr.mxu0 0.0
        %542 = vmatpush1.msra.mxu0 %v290
        %543 = vmatprep.subr.mxu0 0.0
        %544 = vmatpush1.msra.mxu0 %v291
        %545 = vmatprep.subr.mxu0 0.0
        %546 = vmatpush1.msra.mxu0 0.0
        %547 = vmatprep.subr.mxu0 0.0
        %548 = vmatpush1.msra.mxu0 0.0
        %549 = vmatprep.subr.mxu0 0.0
        %550 = vmatpush1.msra.mxu0 0.0
        %551 = vmatprep.subr.mxu0 0.0
        %552 = vmatpush1.msra.mxu0 0.0
        %553 = vmatprep.subr.mxu0 0.0
        %554 = vmatpush1.msra.mxu0 0.0
        %555 = vmatprep.subr.mxu0 0.0
        %556 = vmatpush1.msra.mxu0 0.0
        %557 = vmatprep.subr.mxu0 0.0
        %558 = vmatpush1.msra.mxu0 0.0
        %559 = vmatprep.subr.mxu0 0.0
        %560 = vmatpush1.msra.mxu0 0.0
        %561 = vmatprep.subr.mxu0 0.0
        %562 = vmatpush1.msra.mxu0 0.0
        %563 = vmatprep.subr.mxu0 0.0
        %564 = vmatpush1.msra.mxu0 0.0
        %565 = vmatprep.subr.mxu0 0.0
        %566 = vmatpush1.msra.mxu0 0.0
        %567 = vmatprep.subr.mxu0 0.0
        %568 = vmatpush1.msra.mxu0 0.0
        %569 = vmatprep.subr.mxu0 0.0
        %570 = vmatpush1.msra.mxu0 0.0
        %571 = vmatprep.subr.mxu0 0.0
        %572 = vmatpush1.msra.mxu0 0.0
        %573 = vmatprep.subr.mxu0 0.0
        %574 = vmatpush1.msra.mxu0 0.0
        %575 = vmatprep.subr.mxu0 0.0
        %576 = vmatpush1.msra.mxu0 0.0
        %577 = vmatprep.subr.mxu0 0.0
        %578 = vmatpush1.msra.mxu0 0.0
        %579 = vmatprep.subr.mxu0 0.0
        %580 = vmatpush1.msra.mxu0 0.0
        %581 = vmatprep.subr.mxu0 0.0
        %582 = vmatpush1.msra.mxu0 0.0
        %583 = vmatprep.subr.mxu0 0.0
        %584 = vmatpush1.msra.mxu0 0.0
        %585 = vmatprep.subr.mxu0 0.0
        %586 = vmatpush1.msra.mxu0 0.0
        %587 = vmatprep.subr.mxu0 0.0
        %588 = vmatpush1.msra.mxu0 0.0
        %589 = vmatprep.subr.mxu0 0.0
        %590 = vmatpush1.msra.mxu0 0.0
        %591 = vmatprep.subr.mxu0 0.0
        %592 = vmatpush1.msra.mxu0 0.0
        %593 = vmatprep.subr.mxu0 0.0
        %594 = vmatpush1.msra.mxu0 0.0
        %595 = vmatprep.subr.mxu0 0.0
        %596 = vmatpush1.msra.mxu0 0.0
        %597 = vmatprep.subr.mxu0 0.0
        %598 = vmatpush1.msra.mxu0 0.0
        %599 = vmatprep.subr.mxu0 0.0
        %600 = vmatpush1.msra.mxu0 0.0
        %601 = vmatprep.mubr.f32.mxu0 0.0
        %602 = vmatmul.mubr.f32.gmra.mrb[0].mxu0 %v535
        %v603 = vpop.f32.mrb[0].mxu0
        %v604 = vadd.f32 0.0, %v603
        %v605 = vpop.f32.mrb[0].mxu0
        %606 = vdwg.mxu0
        %v607 = vadd.f32 %v534, %v604
        %v608 = vxor.u32 %v607, 2147483648
        %v609 = vmul.f32 %v608, 1.442695
        %v610 = vpow.pop %v609
        %v611 = vadd.f32 %v610, 1.0
        %v612 = vrcp.pop %v611
        %v613 = vmul.f32 1.0, %v612
        %v614 = vadd.f32 %v604, %v499
        %616 = vrot.lane.b32.xlu0 %v614, 64
        %v617 = vpop.permute.xlu0 %616
        %v619 = vmul.f32 %v613, %v617
        %621 = vrot.lane.b32.xlu0 %v619, 64
        %v622 = vpop.permute.xlu0 %621
        %v624 = vadd.f32 %v534, %v622
        %v625 = vtanh.pop %v624
        %v626 = vsub.f32 %v527, %v625
        %628 = vrot.lane.b32.xlu0 %v626, 96
        %v629 = vpop.permute.xlu0 %628
        %v631 = vmul.f32 %v613, %v629
        %633 = vrot.lane.b32.xlu0 %v631, 32
        %v634 = vpop.permute.xlu0 %633
        %v636 = vadd.f32 %v625, %v634
        %638 = vrot.lane.b32.xlu0 %v636, 64
        %v639 = vpop.permute.xlu0 %638
        %s641 = scalar_lea.vmem %s279, 8
        %642 = vst.msk [vmem:[%s641] sm:$0xff] %vm307, %v639
        %s643 = scalar_lea.vmem [#allocation3], 16
        %v644 = vld [vmem:[%s643] sm:$0xff]
        %v645 = vsel %vm307, %v639, 0
        %647 = vmatprep.subr.mxu0 0.0
        %648 = vmatpush1.msra.mxu0 %v288
        %649 = vmatprep.subr.mxu0 0.0
        %650 = vmatpush1.msra.mxu0 %v289
        %651 = vmatprep.subr.mxu0 0.0
        %652 = vmatpush1.msra.mxu0 %v290
        %653 = vmatprep.subr.mxu0 0.0
        %654 = vmatpush1.msra.mxu0 %v291
        %655 = vmatprep.subr.mxu0 0.0
        %656 = vmatpush1.msra.mxu0 0.0
        %657 = vmatprep.subr.mxu0 0.0
        %658 = vmatpush1.msra.mxu0 0.0
        %659 = vmatprep.subr.mxu0 0.0
        %660 = vmatpush1.msra.mxu0 0.0
        %661 = vmatprep.subr.mxu0 0.0
        %662 = vmatpush1.msra.mxu0 0.0
        %663 = vmatprep.subr.mxu0 0.0
        %664 = vmatpush1.msra.mxu0 0.0
        %665 = vmatprep.subr.mxu0 0.0
        %666 = vmatpush1.msra.mxu0 0.0
        %667 = vmatprep.subr.mxu0 0.0
        %668 = vmatpush1.msra.mxu0 0.0
        %669 = vmatprep.subr.mxu0 0.0
        %670 = vmatpush1.msra.mxu0 0.0
        %671 = vmatprep.subr.mxu0 0.0
        %672 = vmatpush1.msra.mxu0 0.0
        %673 = vmatprep.subr.mxu0 0.0
        %674 = vmatpush1.msra.mxu0 0.0
        %675 = vmatprep.subr.mxu0 0.0
        %676 = vmatpush1.msra.mxu0 0.0
        %677 = vmatprep.subr.mxu0 0.0
        %678 = vmatpush1.msra.mxu0 0.0
        %679 = vmatprep.subr.mxu0 0.0
        %680 = vmatpush1.msra.mxu0 0.0
        %681 = vmatprep.subr.mxu0 0.0
        %682 = vmatpush1.msra.mxu0 0.0
        %683 = vmatprep.subr.mxu0 0.0
        %684 = vmatpush1.msra.mxu0 0.0
        %685 = vmatprep.subr.mxu0 0.0
        %686 = vmatpush1.msra.mxu0 0.0
        %687 = vmatprep.subr.mxu0 0.0
        %688 = vmatpush1.msra.mxu0 0.0
        %689 = vmatprep.subr.mxu0 0.0
        %690 = vmatpush1.msra.mxu0 0.0
        %691 = vmatprep.subr.mxu0 0.0
        %692 = vmatpush1.msra.mxu0 0.0
        %693 = vmatprep.subr.mxu0 0.0
        %694 = vmatpush1.msra.mxu0 0.0
        %695 = vmatprep.subr.mxu0 0.0
        %696 = vmatpush1.msra.mxu0 0.0
        %697 = vmatprep.subr.mxu0 0.0
        %698 = vmatpush1.msra.mxu0 0.0
        %699 = vmatprep.subr.mxu0 0.0
        %700 = vmatpush1.msra.mxu0 0.0
        %701 = vmatprep.subr.mxu0 0.0
        %702 = vmatpush1.msra.mxu0 0.0
        %703 = vmatprep.subr.mxu0 0.0
        %704 = vmatpush1.msra.mxu0 0.0
        %705 = vmatprep.subr.mxu0 0.0
        %706 = vmatpush1.msra.mxu0 0.0
        %707 = vmatprep.subr.mxu0 0.0
        %708 = vmatpush1.msra.mxu0 0.0
        %709 = vmatprep.subr.mxu0 0.0
        %710 = vmatpush1.msra.mxu0 0.0
        %711 = vmatprep.mubr.f32.mxu0 0.0
        %712 = vmatmul.mubr.f32.gmra.mrb[0].mxu0 %v645
        %v713 = vpop.f32.mrb[0].mxu0
        %v714 = vadd.f32 0.0, %v713
        %v715 = vpop.f32.mrb[0].mxu0
        %716 = vdwg.mxu0
        %v717 = vadd.f32 %v644, %v714
        %v718 = vxor.u32 %v717, 2147483648
        %v719 = vmul.f32 %v718, 1.442695
        %v720 = vpow.pop %v719
        %v721 = vadd.f32 %v720, 1.0
        %v722 = vrcp.pop %v721
        %v723 = vmul.f32 1.0, %v722
        %v724 = vadd.f32 %v714, %v499
        %726 = vrot.lane.b32.xlu0 %v724, 64
        %v727 = vpop.permute.xlu0 %726
        %v729 = vmul.f32 %v723, %v727
        %731 = vrot.lane.b32.xlu0 %v729, 64
        %v732 = vpop.permute.xlu0 %731
        %v734 = vadd.f32 %v644, %v732
        %v735 = vtanh.pop %v734
        %v736 = vsub.f32 %v636, %v735
        %738 = vrot.lane.b32.xlu0 %v736, 96
        %v739 = vpop.permute.xlu0 %738
        %v741 = vmul.f32 %v723, %v739
        %743 = vrot.lane.b32.xlu0 %v741, 32
        %v744 = vpop.permute.xlu0 %743
        %v746 = vadd.f32 %v735, %v744
        %748 = vrot.lane.b32.xlu0 %v746, 64
        %v749 = vpop.permute.xlu0 %748
        %s751 = scalar_lea.vmem %s279, 16
        %752 = vst.msk [vmem:[%s751] sm:$0xff] %vm307, %v749
        %s753 = scalar_lea.vmem [#allocation3], 24
        %v754 = vld [vmem:[%s753] sm:$0xff]
        %v755 = vsel %vm307, %v749, 0
        %757 = vmatprep.subr.mxu0 0.0
        %758 = vmatpush1.msra.mxu0 %v288
        %759 = vmatprep.subr.mxu0 0.0
        %760 = vmatpush1.msra.mxu0 %v289
        %761 = vmatprep.subr.mxu0 0.0
        %762 = vmatpush1.msra.mxu0 %v290
        %763 = vmatprep.subr.mxu0 0.0
        %764 = vmatpush1.msra.mxu0 %v291
        %765 = vmatprep.subr.mxu0 0.0
        %766 = vmatpush1.msra.mxu0 0.0
        %767 = vmatprep.subr.mxu0 0.0
        %768 = vmatpush1.msra.mxu0 0.0
        %769 = vmatprep.subr.mxu0 0.0
        %770 = vmatpush1.msra.mxu0 0.0
        %771 = vmatprep.subr.mxu0 0.0
        %772 = vmatpush1.msra.mxu0 0.0
        %773 = vmatprep.subr.mxu0 0.0
        %774 = vmatpush1.msra.mxu0 0.0
        %775 = vmatprep.subr.mxu0 0.0
        %776 = vmatpush1.msra.mxu0 0.0
        %777 = vmatprep.subr.mxu0 0.0
        %778 = vmatpush1.msra.mxu0 0.0
        %779 = vmatprep.subr.mxu0 0.0
        %780 = vmatpush1.msra.mxu0 0.0
        %781 = vmatprep.subr.mxu0 0.0
        %782 = vmatpush1.msra.mxu0 0.0
        %783 = vmatprep.subr.mxu0 0.0
        %784 = vmatpush1.msra.mxu0 0.0
        %785 = vmatprep.subr.mxu0 0.0
        %786 = vmatpush1.msra.mxu0 0.0
        %787 = vmatprep.subr.mxu0 0.0
        %788 = vmatpush1.msra.mxu0 0.0
        %789 = vmatprep.subr.mxu0 0.0
        %790 = vmatpush1.msra.mxu0 0.0
        %791 = vmatprep.subr.mxu0 0.0
        %792 = vmatpush1.msra.mxu0 0.0
        %793 = vmatprep.subr.mxu0 0.0
        %794 = vmatpush1.msra.mxu0 0.0
        %795 = vmatprep.subr.mxu0 0.0
        %796 = vmatpush1.msra.mxu0 0.0
        %797 = vmatprep.subr.mxu0 0.0
        %798 = vmatpush1.msra.mxu0 0.0
        %799 = vmatprep.subr.mxu0 0.0
        %800 = vmatpush1.msra.mxu0 0.0
        %801 = vmatprep.subr.mxu0 0.0
        %802 = vmatpush1.msra.mxu0 0.0
        %803 = vmatprep.subr.mxu0 0.0
        %804 = vmatpush1.msra.mxu0 0.0
        %805 = vmatprep.subr.mxu0 0.0
        %806 = vmatpush1.msra.mxu0 0.0
        %807 = vmatprep.subr.mxu0 0.0
        %808 = vmatpush1.msra.mxu0 0.0
        %809 = vmatprep.subr.mxu0 0.0
        %810 = vmatpush1.msra.mxu0 0.0
        %811 = vmatprep.subr.mxu0 0.0
        %812 = vmatpush1.msra.mxu0 0.0
        %813 = vmatprep.subr.mxu0 0.0
        %814 = vmatpush1.msra.mxu0 0.0
        %815 = vmatprep.subr.mxu0 0.0
        %816 = vmatpush1.msra.mxu0 0.0
        %817 = vmatprep.subr.mxu0 0.0
        %818 = vmatpush1.msra.mxu0 0.0
        %819 = vmatprep.subr.mxu0 0.0
        %820 = vmatpush1.msra.mxu0 0.0
        %821 = vmatprep.mubr.f32.mxu0 0.0
        %822 = vmatmul.mubr.f32.gmra.mrb[0].mxu0 %v755
        %v823 = vpop.f32.mrb[0].mxu0
        %v824 = vadd.f32 0.0, %v823
        %v825 = vpop.f32.mrb[0].mxu0
        %826 = vdwg.mxu0
        %v827 = vadd.f32 %v754, %v824
        %v828 = vxor.u32 %v827, 2147483648
        %v829 = vmul.f32 %v828, 1.442695
        %v830 = vpow.pop %v829
        %v831 = vadd.f32 %v830, 1.0
        %v832 = vrcp.pop %v831
        %v833 = vmul.f32 1.0, %v832
        %v834 = vadd.f32 %v824, %v499
        %836 = vrot.lane.b32.xlu0 %v834, 64
        %v837 = vpop.permute.xlu0 %836
        %v839 = vmul.f32 %v833, %v837
        %841 = vrot.lane.b32.xlu0 %v839, 64
        %v842 = vpop.permute.xlu0 %841
        %v844 = vadd.f32 %v754, %v842
        %v845 = vtanh.pop %v844
        %v846 = vsub.f32 %v746, %v845
        %848 = vrot.lane.b32.xlu0 %v846, 96
        %v849 = vpop.permute.xlu0 %848
        %v851 = vmul.f32 %v833, %v849
        %853 = vrot.lane.b32.xlu0 %v851, 32
        %v854 = vpop.permute.xlu0 %853
        %v856 = vadd.f32 %v845, %v854
        %858 = vrot.lane.b32.xlu0 %v856, 64
        %v859 = vpop.permute.xlu0 %858
        %s861 = scalar_lea.vmem %s279, 24
        %862 = vst.msk [vmem:[%s861] sm:$0xff] %vm307, %v859
        %863 = vst.msk [vmem:[#allocation2] sm:$0xff] %vm307, %v859
        %p864 = scmp.eq.s32.totalorder %s20, 1
        // Predicated region
        $region49: #{tpu_custom_call.1} parent=43 // pred_check
          %p865 = pneg %p864
        $region50: #{tpu_custom_call.1} parent=43 // pred_check_branch
          %867 = sbr.rel (%p865) target = $region52
        $region51: #{tpu_custom_call.1} parent=43 // pred_region
          %868 = vst.msk [vmem:[#allocation4] sm:$0xff] %vm307, %v859
        $region52: #{tpu_custom_call.1} parent=43 // pred_fallthru
          _
        %s869 = smul.u32 4, %s20
        %p870 = scmp.lt.s32.totalorder %s869, 7
        %s871 = scalar_select %p870, %s869, 7
        %s872 = smul.addr %s871, 8
        %s873 = scalar_lea.vmem %s6, %s872
        // Predicated region
        $region53: #{tpu_custom_call.1} parent=43 // pred_check
          %p874 = pneg %p169
        $region54: #{tpu_custom_call.1} parent=43 // pred_check_branch
          %876 = sbr.rel (%p874) target = $region56
        $region55: #{tpu_custom_call.1} parent=43 // pred_region
          %s877 = smul.u32 4, %s20
        $region56: #{tpu_custom_call.1} parent=43 // pred_fallthru
          _
        // Predicated region
        $region57: #{tpu_custom_call.1} parent=43 // pred_check
          %p878 = pneg %p190
        $region58: #{tpu_custom_call.1} parent=43 // pred_check_branch
          %880 = sbr.rel (%p878) target = $region60
        $region59: #{tpu_custom_call.1} parent=43 // pred_region
          %s882 = ssub.s32 128, 128
          %883 = vsyncadd [#allocation5], %s882
          %s885 = sshll.u32 [#allocation4], 4
          %s886 = int_to_ptr.vmem [resolvable:$true] %s885
          %888 = dma.vmem_to_hbm [thread:$0]  %s886, 128, %s7, [#allocation5]
        $region60: #{tpu_custom_call.1} parent=43 // pred_fallthru
          _
        // Predicated region
        $region61: #{tpu_custom_call.1} parent=43 // pred_check
          %p889 = pneg %p190
        $region62: #{tpu_custom_call.1} parent=43 // pred_check_branch
          %891 = sbr.rel (%p889) target = $region64
        $region63: #{tpu_custom_call.1} parent=43 // pred_region
          %892 = dma.done [#allocation5], 128
        $region64: #{tpu_custom_call.1} parent=43 // pred_fallthru
          _
      $region44: #{tpu_custom_call.1} parent=5 // pred_fallthru
        _
      %p893 = scmp.le.s32.totalorder 2, %s15
      // Predicated region
      $region65: #{tpu_custom_call.1} parent=5 // pred_check
        %p894 = pneg %p893
      $region66: #{tpu_custom_call.1} parent=5 // pred_check_branch
        %896 = sbr.rel (%p894) target = $region68
      $region67: #{tpu_custom_call.1} parent=5 // pred_region
        %s897 = ssub.s32 %s15, 2
        // Predicated region
        $region69: #{tpu_custom_call.1} parent=67 // pred_check
          %p898 = pneg %p175
        $region70: #{tpu_custom_call.1} parent=67 // pred_check_branch
          %900 = sbr.rel (%p898) target = $region72
        $region71: #{tpu_custom_call.1} parent=67 // pred_region
          %s901 = smul.u32 4, %s21
          %p902 = scmp.lt.s32.totalorder %s901, 7
          %s903 = scalar_select %p902, %s901, 7
          %s904 = smul.addr %s903, 8
          %s905 = scalar_lea.vmem %s6, %s904
        $region72: #{tpu_custom_call.1} parent=67 // pred_fallthru
          _
      $region68: #{tpu_custom_call.1} parent=5 // pred_fallthru
        _
    $region6: #{tpu_custom_call.1} parent=1 // loop_footer
      %s19 = sadd.s32 1, %s15
    $region7: #{tpu_custom_call.1} parent=1 // loop_footer_branch
      %14 = sbr.rel target = $region3
    $region8: #{tpu_custom_call.1} parent=1 // loop_exit
      _
    %906 = vsyncpa [#allocation5], 1
    %s907 = scalar_lea.sflag [#allocation5], 1
    %908 = vsyncpa %s907, 1

// kernel: tpu_custom_call.1
$region0: #{tpu_custom_call.1}
  #allocation0 [shape = 'u32[]', space=smem, size = 0x4, offset = 0x4, fixed_abs, tag = 'smem constant byte address 0x4 - core index']
  #allocation1 [shape = 'u32[144,128]{1,0:T(1,128)}', space=vmem, size = 0x12000, scoped, tag = 'internal scratch']
  #allocation2 [shape = 'f32[8,32]{1,0:T(8,128)}', space=vmem, size = 0x1000, scoped, tag = 'scratch operand']
  #allocation3 [shape = 'f32[32,96]{1,0:T(8,128)}', space=vmem, size = 0x4000, scoped, tag = 'scratch operand']
  %s0 = inlined_call_operand.vmem [shape: f32[1,8,32], index: 0, kind: input, shape index: {}]
  %s1 = inlined_call_operand.vmem [shape: f32[64,32], index: 1, kind: input, shape index: {}]
  %s2 = inlined_call_operand.vmem [shape: f32[32,96], index: 2, kind: input, shape index: {}]
  %s3 = inlined_call_operand.vmem [shape: f32[32,96], index: 3, kind: input, shape index: {}]
  %s4 = inlined_call_operand.vmem [shape: f32[1,96], index: 4, kind: input, shape index: {}]
  %s5 = inlined_call_operand.vmem [shape: f32[1,32], index: 5, kind: input, shape index: {}]
  %s6 = inlined_call_operand.vmem [shape: f32[64,32], index: 6, kind: output, shape index: {0}]
  %s7 = inlined_call_operand.hbm [shape: f32[1,8,32], index: 7, kind: output, shape index: {1}]
  %8 = xla_tuple %s6, %s7
  %s9 = sld [smem:[#allocation0]]
  $region73: #{tpu_custom_call.1} parent=0
    _
  %s11 = ssub.s32 1, %s9
  %s12 = scalar_select 0, %s11, %s9
  $region1: #{tpu_custom_call.1} parent=0
    #allocation4 [shape = 'u8[4096]{0}', space=vmem, size = 0x1000, scoped, tag = 'output window, operand 1, single buffered']
    #allocation5 [shape = 's32[2]{0}', space=sflag, size = 0x8, scoped, tag = 'scoped memory for tpu_custom_call.1']
    %13 = vsyncpa [#allocation5], 0
    loop: start=0, step=1, limit=4
    $region2: #{tpu_custom_call.1} parent=1 // loop_pre_header
      _
    $region3: #{tpu_custom_call.1} parent=1 // loop_header
      %s15 = sphi 0, %s19
      %p16 = scmp.ge.s32.totalorder %s15, 4
      %s23 = sphi 0, %s23
      %s25 = sphi 0, %s23
      %s26 = sphi 0, %s25
      %s40 = sphi 0, %s26
      %s46 = sphi 0, %s48
      %s49 = sphi 0, %s46
      %s50 = sphi 0, %s49
      %s66 = sphi 0, %s50
      %s70 = sphi 0, %s70
      %s72 = sphi 0, %s70
      %s73 = sphi 0, %s72
      %s87 = sphi 0, %s73
      %s91 = sphi 0, %s91
      %s93 = sphi 0, %s91
      %s94 = sphi 0, %s93
      %s108 = sphi 0, %s94
      %s112 = sphi 0, %s112
      %s114 = sphi 0, %s112
      %s115 = sphi 0, %s114
      %s129 = sphi 0, %s115
      %s133 = sphi 0, %s133
      %s135 = sphi 0, %s133
      %s136 = sphi 0, %s135
      %s150 = sphi 0, %s136
      %s156 = sphi 0, %s158
      %s159 = sphi 0, %s156
      %s160 = sphi 0, %s159
      %s176 = sphi 0, %s160
      %s180 = sphi 0, %s180
      %s182 = sphi 0, %s180
      %s183 = sphi 0, %s182
      %s197 = sphi 0, %s183
    $region4: #{tpu_custom_call.1} parent=1 // loop_header_branch
      %18 = sbr.rel (%p16) target = $region8
    $region5: #{tpu_custom_call.1} parent=1 // loop_body
      %s20 = ssub.s32 %s15, 1
      %s21 = ssub.s32 %s15, 2
      %s22 = sadd.s32 %s15, 1
      %s24 = sadd.s32 %s23, 1
      %p27 = scmp.eq.s32.totalorder %s15, 1
      %p28 = scmp.ne.s32.totalorder %s23, %s25
      %p29 = scmp.eq.s32.totalorder %s15, 0
      %p30 = por %p28, %p29
      %p31 = scmp.ne.s32.totalorder %s23, %s25
      %p32 = scmp.eq.s32.totalorder %s20, 1
      %p33 = por %p31, %p32
      %p34 = scmp.ne.s32.totalorder %s25, %s26
      %p35 = scmp.eq.s32.totalorder %s20, 0
      %p36 = por %p34, %p35
      %p37 = scmp.ne.s32.totalorder %s25, %s26
      %p38 = scmp.eq.s32.totalorder %s21, 1
      %p39 = por %p37, %p38
      %p41 = scmp.ne.s32.totalorder %s26, %s40
      %p42 = scmp.eq.s32.totalorder %s21, 0
      %p43 = por %p41, %p42
      %s44 = ssub.s32 %s15, %s22
      %p45 = scmp.eq.s32.totalorder %s44, 0
      %s47 = sadd.s32 %s46, 1
      %s48 = scalar_select %p45, %s46, %s47
      %p51 = pneg %p45
      %p52 = scmp.eq.s32.totalorder %s15, 1
      %p53 = por %p51, %p52
      %p54 = scmp.ne.s32.totalorder %s46, %s49
      %p55 = scmp.eq.s32.totalorder %s15, 0
      %p56 = por %p54, %p55
      %p57 = scmp.ne.s32.totalorder %s46, %s49
      %p58 = scmp.eq.s32.totalorder %s20, 1
      %p59 = por %p57, %p58
      %p60 = scmp.ne.s32.totalorder %s49, %s50
      %p61 = scmp.eq.s32.totalorder %s20, 0
      %p62 = por %p60, %p61
      %p63 = scmp.ne.s32.totalorder %s49, %s50
      %p64 = scmp.eq.s32.totalorder %s21, 1
      %p65 = por %p63, %p64
      %p67 = scmp.ne.s32.totalorder %s50, %s66
      %p68 = scmp.eq.s32.totalorder %s21, 0
      %p69 = por %p67, %p68
      %s71 = sadd.s32 %s70, 1
      %p74 = scmp.eq.s32.totalorder %s15, 1
      %p75 = scmp.ne.s32.totalorder %s70, %s72
      %p76 = scmp.eq.s32.totalorder %s15, 0
      %p77 = por %p75, %p76
      %p78 = scmp.ne.s32.totalorder %s70, %s72
      %p79 = scmp.eq.s32.totalorder %s20, 1
      %p80 = por %p78, %p79
      %p81 = scmp.ne.s32.totalorder %s72, %s73
      %p82 = scmp.eq.s32.totalorder %s20, 0
      %p83 = por %p81, %p82
      %p84 = scmp.ne.s32.totalorder %s72, %s73
      %p85 = scmp.eq.s32.totalorder %s21, 1
      %p86 = por %p84, %p85
      %p88 = scmp.ne.s32.totalorder %s73, %s87
      %p89 = scmp.eq.s32.totalorder %s21, 0
      %p90 = por %p88, %p89
      %s92 = sadd.s32 %s91, 1
      %p95 = scmp.eq.s32.totalorder %s15, 1
      %p96 = scmp.ne.s32.totalorder %s91, %s93
      %p97 = scmp.eq.s32.totalorder %s15, 0
      %p98 = por %p96, %p97
      %p99 = scmp.ne.s32.totalorder %s91, %s93
      %p100 = scmp.eq.s32.totalorder %s20, 1
      %p101 = por %p99, %p100
      %p102 = scmp.ne.s32.totalorder %s93, %s94
      %p103 = scmp.eq.s32.totalorder %s20, 0
      %p104 = por %p102, %p103
      %p105 = scmp.ne.s32.totalorder %s93, %s94
      %p106 = scmp.eq.s32.totalorder %s21, 1
      %p107 = por %p105, %p106
      %p109 = scmp.ne.s32.totalorder %s94, %s108
      %p110 = scmp.eq.s32.totalorder %s21, 0
      %p111 = por %p109, %p110
      %s113 = sadd.s32 %s112, 1
      %p116 = scmp.eq.s32.totalorder %s15, 1
      %p117 = scmp.ne.s32.totalorder %s112, %s114
      %p118 = scmp.eq.s32.totalorder %s15, 0
      %p119 = por %p117, %p118
      %p120 = scmp.ne.s32.totalorder %s112, %s114
      %p121 = scmp.eq.s32.totalorder %s20, 1
      %p122 = por %p120, %p121
      %p123 = scmp.ne.s32.totalorder %s114, %s115
      %p124 = scmp.eq.s32.totalorder %s20, 0
      %p125 = por %p123, %p124
      %p126 = scmp.ne.s32.totalorder %s114, %s115
      %p127 = scmp.eq.s32.totalorder %s21, 1
      %p128 = por %p126, %p127
      %p130 = scmp.ne.s32.totalorder %s115, %s129
      %p131 = scmp.eq.s32.totalorder %s21, 0
      %p132 = por %p130, %p131
      %s134 = sadd.s32 %s133, 1
      %p137 = scmp.eq.s32.totalorder %s15, 1
      %p138 = scmp.ne.s32.totalorder %s133, %s135
      %p139 = scmp.eq.s32.totalorder %s15, 0
      %p140 = por %p138, %p139
      %p141 = scmp.ne.s32.totalorder %s133, %s135
      %p142 = scmp.eq.s32.totalorder %s20, 1
      %p143 = por %p141, %p142
      %p144 = scmp.ne.s32.totalorder %s135, %s136
      %p145 = scmp.eq.s32.totalorder %s20, 0
      %p146 = por %p144, %p145
      %p147 = scmp.ne.s32.totalorder %s135, %s136
      %p148 = scmp.eq.s32.totalorder %s21, 1
      %p149 = por %p147, %p148
      %p151 = scmp.ne.s32.totalorder %s136, %s150
      %p152 = scmp.eq.s32.totalorder %s21, 0
      %p153 = por %p151, %p152
      %s154 = ssub.s32 %s15, %s22
      %p155 = scmp.eq.s32.totalorder %s154, 0
      %s157 = sadd.s32 %s156, 1
      %s158 = scalar_select %p155, %s156, %s157
      %p161 = pneg %p155
      %p162 = scmp.eq.s32.totalorder %s15, 1
      %p163 = por %p161, %p162
      %p164 = scmp.ne.s32.totalorder %s156, %s159
      %p165 = scmp.eq.s32.totalorder %s15, 0
      %p166 = por %p164, %p165
      %p167 = scmp.ne.s32.totalorder %s156, %s159
      %p168 = scmp.eq.s32.totalorder %s20, 1
      %p169 = por %p167, %p168
      %p170 = scmp.ne.s32.totalorder %s159, %s160
      %p171 = scmp.eq.s32.totalorder %s20, 0
      %p172 = por %p170, %p171
      %p173 = scmp.ne.s32.totalorder %s159, %s160
      %p174 = scmp.eq.s32.totalorder %s21, 1
      %p175 = por %p173, %p174
      %p177 = scmp.ne.s32.totalorder %s160, %s176
      %p178 = scmp.eq.s32.totalorder %s21, 0
      %p179 = por %p177, %p178
      %s181 = sadd.s32 %s180, 1
      %p184 = scmp.eq.s32.totalorder %s15, 1
      %p185 = scmp.ne.s32.totalorder %s180, %s182
      %p186 = scmp.eq.s32.totalorder %s15, 0
      %p187 = por %p185, %p186
      %p188 = scmp.ne.s32.totalorder %s180, %s182
      %p189 = scmp.eq.s32.totalorder %s20, 1
      %p190 = por %p188, %p189
      %p191 = scmp.ne.s32.totalorder %s182, %s183
      %p192 = scmp.eq.s32.totalorder %s20, 0
      %p193 = por %p191, %p192
      %p194 = scmp.ne.s32.totalorder %s182, %s183
      %p195 = scmp.eq.s32.totalorder %s21, 1
      %p196 = por %p194, %p195
      %p198 = scmp.ne.s32.totalorder %s183, %s197
      %p199 = scmp.eq.s32.totalorder %s21, 0
      %p200 = por %p198, %p199
      %p201 = scmp.le.s32.totalorder 1, %s15
      %p202 = scmp.lt.s32.totalorder %s15, 3
      %p203 = pnand %p201, %p202
      %p204 = pneg %p203
      // Predicated region
      $region9: #{tpu_custom_call.1} parent=5 // pred_check
        _
      $region10: #{tpu_custom_call.1} parent=5 // pred_check_branch
        %206 = sbr.rel (%p203) target = $region12
      $region11: #{tpu_custom_call.1} parent=5 // pred_region
        %s207 = ssub.s32 %s15, 1
        // Predicated region
        $region13: #{tpu_custom_call.1} parent=11 // pred_check
          %p208 = pneg %p36
        $region14: #{tpu_custom_call.1} parent=11 // pred_check_branch
          %210 = sbr.rel (%p208) target = $region16
        $region15: #{tpu_custom_call.1} parent=11 // pred_region
          _
        $region16: #{tpu_custom_call.1} parent=11 // pred_fallthru
          _
        // Predicated region
        $region17: #{tpu_custom_call.1} parent=11 // pred_check
          %p211 = pneg %p83
        $region18: #{tpu_custom_call.1} parent=11 // pred_check_branch
          %213 = sbr.rel (%p211) target = $region20
        $region19: #{tpu_custom_call.1} parent=11 // pred_region
          _
        $region20: #{tpu_custom_call.1} parent=11 // pred_fallthru
          _
        // Predicated region
        $region21: #{tpu_custom_call.1} parent=11 // pred_check
          %p214 = pneg %p104
        $region22: #{tpu_custom_call.1} parent=11 // pred_check_branch
          %216 = sbr.rel (%p214) target = $region24
        $region23: #{tpu_custom_call.1} parent=11 // pred_region
          _
        $region24: #{tpu_custom_call.1} parent=11 // pred_fallthru
          _
        // Predicated region
        $region25: #{tpu_custom_call.1} parent=11 // pred_check
          %p217 = pneg %p125
        $region26: #{tpu_custom_call.1} parent=11 // pred_check_branch
          %219 = sbr.rel (%p217) target = $region28
        $region27: #{tpu_custom_call.1} parent=11 // pred_region
          _
        $region28: #{tpu_custom_call.1} parent=11 // pred_fallthru
          _
        // Predicated region
        $region29: #{tpu_custom_call.1} parent=11 // pred_check
          %p220 = pneg %p146
        $region30: #{tpu_custom_call.1} parent=11 // pred_check_branch
          %222 = sbr.rel (%p220) target = $region32
        $region31: #{tpu_custom_call.1} parent=11 // pred_region
          _
        $region32: #{tpu_custom_call.1} parent=11 // pred_fallthru
          _
      $region12: #{tpu_custom_call.1} parent=5 // pred_fallthru
        _
      %p223 = scmp.lt.s32.totalorder %s15, 2
      // Predicated region
      $region33: #{tpu_custom_call.1} parent=5 // pred_check
        %p224 = pneg %p223
      $region34: #{tpu_custom_call.1} parent=5 // pred_check_branch
        %226 = sbr.rel (%p224) target = $region36
      $region35: #{tpu_custom_call.1} parent=5 // pred_region
        // Predicated region
        $region37: #{tpu_custom_call.1} parent=35 // pred_check
          %p227 = pneg %p56
        $region38: #{tpu_custom_call.1} parent=35 // pred_check_branch
          %229 = sbr.rel (%p227) target = $region40
        $region39: #{tpu_custom_call.1} parent=35 // pred_region
          %s230 = smul.u32 4, %s15
          %p231 = scmp.lt.s32.totalorder %s230, 7
          %s232 = scalar_select %p231, %s230, 7
          %s233 = smul.addr %s232, 8
          %s234 = scalar_lea.vmem %s1, %s233
          %s235 = smul.u32 4, %s15
        $region40: #{tpu_custom_call.1} parent=35 // pred_fallthru
          _
      $region36: #{tpu_custom_call.1} parent=5 // pred_fallthru
        _
      %p236 = scmp.le.s32.totalorder 1, %s15
      %p237 = scmp.lt.s32.totalorder %s15, 3
      %p238 = pnand %p236, %p237
      %p239 = pneg %p238
      // Predicated region
      $region41: #{tpu_custom_call.1} parent=5 // pred_check
        _
      $region42: #{tpu_custom_call.1} parent=5 // pred_check_branch
        %241 = sbr.rel (%p238) target = $region44
      $region43: #{tpu_custom_call.1} parent=5 // pred_region
        %s242 = ssub.s32 %s15, 1
        %p243 = pneg %p36
        %p244 = pneg %p33
        %s245 = smul.u32 4, %s20
        %p246 = scmp.lt.s32.totalorder %s245, 7
        %s247 = scalar_select %p246, %s245, 7
        %s248 = smul.addr %s247, 8
        %s249 = scalar_lea.vmem %s1, %s248
        %p250 = pneg %p62
        %p251 = pneg %p59
        %p252 = pneg %p83
        %p253 = pneg %p80
        %p254 = pneg %p104
        %p255 = pneg %p101
        %p256 = pneg %p125
        %p257 = pneg %p122
        %p258 = pneg %p146
        %p259 = pneg %p143
        %p260 = pneg %p172
        %p261 = pneg %p169
        %s262 = smul.u32 4, %s20
        %p263 = scmp.lt.s32.totalorder %s262, 7
        %s264 = scalar_select %p263, %s262, 7
        %s265 = smul.addr %s264, 8
        %s266 = scalar_lea.vmem %s6, %s265
        %p267 = pneg %p193
        %p268 = pneg %p190
        %s269 = smul.u32 4, %s20
        %p270 = scmp.lt.s32.totalorder %s269, 7
        %s271 = scalar_select %p270, %s269, 7
        %s272 = smul.addr %s271, 8
        %s273 = scalar_lea.vmem %s1, %s272
        %s274 = smul.u32 4, %s20
        %s275 = smul.u32 4, %s20
        %p276 = scmp.lt.s32.totalorder %s275, 7
        %s277 = scalar_select %p276, %s275, 7
        %s278 = smul.addr %s277, 8
        %s279 = scalar_lea.vmem %s6, %s278
        %s280 = smul.u32 4, %s20
        %p281 = scmp.eq.s32.totalorder %s20, 0
        // Predicated region
        $region45: #{tpu_custom_call.1} parent=43 // pred_check
          %p282 = pneg %p281
        $region46: #{tpu_custom_call.1} parent=43 // pred_check_branch
          %284 = sbr.rel (%p282) target = $region48
        $region47: #{tpu_custom_call.1} parent=43 // pred_region
          %v285 = vld [vmem:[%s0] sm:$0xff]
          %vm286 = vcmask 261120
          %287 = vst.msk [vmem:[#allocation2] sm:$0xff] %vm286, %v285
        $region48: #{tpu_custom_call.1} parent=43 // pred_fallthru
          _
        %v288 = vld [vmem:[%s3] sm:$0xff]
        %v289 = vld [vmem:[%s3 + $0x8] sm:$0xff]
        %v290 = vld [vmem:[%s3 + $0x10] sm:$0xff]
        %v291 = vld [vmem:[%s3 + $0x18] sm:$0xff]
        %v292 = vld [vmem:[%s273] sm:$0xff]
        %v293 = vld [vmem:[%s273 + $0x8] sm:$0xff]
        %v294 = vld [vmem:[%s273 + $0x10] sm:$0xff]
        %v295 = vld [vmem:[%s273 + $0x18] sm:$0xff]
        %v296 = vld [vmem:[%s2] sm:$0xff]
        %v297 = vld [vmem:[%s2 + $0x8] sm:$0xff]
        %v298 = vld [vmem:[%s2 + $0x10] sm:$0xff]
        %v299 = vld [vmem:[%s2 + $0x18] sm:$0xff]
        %v300 = vld [vmem:[%s4] sm:$0x1]
        %v302 = vlaneseq
        %v303 = vshrl.u32 %v302, 7
        %v304 = vsub.s32 0, %v303
        %v305 = vrot.slane %v300, %v304
        %vm307 = vcmask 261120
        %v309 = vsel %vm307, %v292, 0
        %v312 = vsel %vm307, %v293, 0
        %v315 = vsel %vm307, %v294, 0
        %v318 = vsel %vm307, %v295, 0
        %320 = vmatprep.subr.mxu0 0.0
        %321 = vmatpush1.msra.mxu0 %v296
        %322 = vmatprep.subr.mxu0 0.0
        %323 = vmatpush1.msra.mxu0 %v297
        %324 = vmatprep.subr.mxu0 0.0
        %325 = vmatpush1.msra.mxu0 %v298
        %326 = vmatprep.subr.mxu0 0.0
        %327 = vmatpush1.msra.mxu0 %v299
        %328 = vmatprep.subr.mxu0 0.0
        %329 = vmatpush1.msra.mxu0 0.0
        %330 = vmatprep.subr.mxu0 0.0
        %331 = vmatpush1.msra.mxu0 0.0
        %332 = vmatprep.subr.mxu0 0.0
        %333 = vmatpush1.msra.mxu0 0.0
        %334 = vmatprep.subr.mxu0 0.0
        %335 = vmatpush1.msra.mxu0 0.0
        %336 = vmatprep.subr.mxu0 0.0
        %337 = vmatpush1.msra.mxu0 0.0
        %338 = vmatprep.subr.mxu0 0.0
        %339 = vmatpush1.msra.mxu0 0.0
        %340 = vmatprep.subr.mxu0 0.0
        %341 = vmatpush1.msra.mxu0 0.0
        %342 = vmatprep.subr.mxu0 0.0
        %343 = vmatpush1.msra.mxu0 0.0
        %344 = vmatprep.subr.mxu0 0.0
        %345 = vmatpush1.msra.mxu0 0.0
        %346 = vmatprep.subr.mxu0 0.0
        %347 = vmatpush1.msra.mxu0 0.0
        %348 = vmatprep.subr.mxu0 0.0
        %349 = vmatpush1.msra.mxu0 0.0
        %350 = vmatprep.subr.mxu0 0.0
        %351 = vmatpush1.msra.mxu0 0.0
        %352 = vmatprep.subr.mxu0 0.0
        %353 = vmatpush1.msra.mxu0 0.0
        %354 = vmatprep.subr.mxu0 0.0
        %355 = vmatpush1.msra.mxu0 0.0
        %356 = vmatprep.subr.mxu0 0.0
        %357 = vmatpush1.msra.mxu0 0.0
        %358 = vmatprep.subr.mxu0 0.0
        %359 = vmatpush1.msra.mxu0 0.0
        %360 = vmatprep.subr.mxu0 0.0
        %361 = vmatpush1.msra.mxu0 0.0
        %362 = vmatprep.subr.mxu0 0.0
        %363 = vmatpush1.msra.mxu0 0.0
        %364 = vmatprep.subr.mxu0 0.0
        %365 = vmatpush1.msra.mxu0 0.0
        %366 = vmatprep.subr.mxu0 0.0
        %367 = vmatpush1.msra.mxu0 0.0
        %368 = vmatprep.subr.mxu0 0.0
        %369 = vmatpush1.msra.mxu0 0.0
        %370 = vmatprep.subr.mxu0 0.0
        %371 = vmatpush1.msra.mxu0 0.0
        %372 = vmatprep.subr.mxu0 0.0
        %373 = vmatpush1.msra.mxu0 0.0
        %374 = vmatprep.subr.mxu0 0.0
        %375 = vmatpush1.msra.mxu0 0.0
        %376 = vmatprep.subr.mxu0 0.0
        %377 = vmatpush1.msra.mxu0 0.0
        %378 = vmatprep.subr.mxu0 0.0
        %379 = vmatpush1.msra.mxu0 0.0
        %380 = vmatprep.subr.mxu0 0.0
        %381 = vmatpush1.msra.mxu0 0.0
        %382 = vmatprep.subr.mxu0 0.0
        %383 = vmatpush1.msra.mxu0 0.0
        %384 = vmatprep.mubr.f32.mxu0 0.0
        %385 = vmatmul.mubr.f32.gmra.mrb[0].mxu0 %v309
        %v386 = vpop.f32.mrb[0].mxu0
        %v387 = vadd.f32 %v305, %v386
        %v388 = vpop.f32.mrb[0].mxu0
        %389 = vmatprep.mubr.f32.mxu0 0.0
        %390 = vmatmul.mubr.f32.gmra.mrb[0].mxu0 %v312
        %v391 = vpop.f32.mrb[0].mxu0
        %v392 = vadd.f32 %v305, %v391
        %v393 = vpop.f32.mrb[0].mxu0
        %394 = vmatprep.mubr.f32.mxu0 0.0
        %395 = vmatmul.mubr.f32.gmra.mrb[0].mxu0 %v315
        %v396 = vpop.f32.mrb[0].mxu0
        %v397 = vadd.f32 %v305, %v396
        %v398 = vpop.f32.mrb[0].mxu0
        %399 = vmatprep.mubr.f32.mxu0 0.0
        %400 = vmatmul.mubr.f32.gmra.mrb[0].mxu0 %v318
        %v401 = vpop.f32.mrb[0].mxu0
        %v402 = vadd.f32 %v305, %v401
        %v403 = vpop.f32.mrb[0].mxu0
        %404 = vdwg.mxu0
        %vm405 = vcmask 785408
        %406 = vst.msk [vmem:[#allocation3] sm:$0xff] %vm405, %v387
        %407 = vst.msk [vmem:[#allocation3 + $0x8] sm:$0xff] %vm405, %v392
        %408 = vst.msk [vmem:[#allocation3 + $0x10] sm:$0xff] %vm405, %v397
        %409 = vst.msk [vmem:[#allocation3 + $0x18] sm:$0xff] %vm405, %v402
        %v410 = vld [vmem:[%s5] sm:$0x1]
        %v412 = vlaneseq
        %v413 = vshrl.u32 %v412, 7
        %v414 = vsub.s32 0, %v413
        %v415 = vrot.slane %v410, %v414
        %v416 = vld [vmem:[#allocation2] sm:$0xff]
        %v417 = vld [vmem:[#allocation3] sm:$0xff]
        %v419 = vsel %vm307, %v416, 0
        %421 = vmatprep.subr.mxu0 0.0
        %422 = vmatpush1.msra.mxu0 %v288
        %423 = vmatprep.subr.mxu0 0.0
        %424 = vmatpush1.msra.mxu0 %v289
        %425 = vmatprep.subr.mxu0 0.0
        %426 = vmatpush1.msra.mxu0 %v290
        %427 = vmatprep.subr.mxu0 0.0
        %428 = vmatpush1.msra.mxu0 %v291
        %429 = vmatprep.subr.mxu0 0.0
        %430 = vmatpush1.msra.mxu0 0.0
        %431 = vmatprep.subr.mxu0 0.0
        %432 = vmatpush1.msra.mxu0 0.0
        %433 = vmatprep.subr.mxu0 0.0
        %434 = vmatpush1.msra.mxu0 0.0
        %435 = vmatprep.subr.mxu0 0.0
        %436 = vmatpush1.msra.mxu0 0.0
        %437 = vmatprep.subr.mxu0 0.0
        %438 = vmatpush1.msra.mxu0 0.0
        %439 = vmatprep.subr.mxu0 0.0
        %440 = vmatpush1.msra.mxu0 0.0
        %441 = vmatprep.subr.mxu0 0.0
        %442 = vmatpush1.msra.mxu0 0.0
        %443 = vmatprep.subr.mxu0 0.0
        %444 = vmatpush1.msra.mxu0 0.0
        %445 = vmatprep.subr.mxu0 0.0
        %446 = vmatpush1.msra.mxu0 0.0
        %447 = vmatprep.subr.mxu0 0.0
        %448 = vmatpush1.msra.mxu0 0.0
        %449 = vmatprep.subr.mxu0 0.0
        %450 = vmatpush1.msra.mxu0 0.0
        %451 = vmatprep.subr.mxu0 0.0
        %452 = vmatpush1.msra.mxu0 0.0
        %453 = vmatprep.subr.mxu0 0.0
        %454 = vmatpush1.msra.mxu0 0.0
        %455 = vmatprep.subr.mxu0 0.0
        %456 = vmatpush1.msra.mxu0 0.0
        %457 = vmatprep.subr.mxu0 0.0
        %458 = vmatpush1.msra.mxu0 0.0
        %459 = vmatprep.subr.mxu0 0.0
        %460 = vmatpush1.msra.mxu0 0.0
        %461 = vmatprep.subr.mxu0 0.0
        %462 = vmatpush1.msra.mxu0 0.0
        %463 = vmatprep.subr.mxu0 0.0
        %464 = vmatpush1.msra.mxu0 0.0
        %465 = vmatprep.subr.mxu0 0.0
        %466 = vmatpush1.msra.mxu0 0.0
        %467 = vmatprep.subr.mxu0 0.0
        %468 = vmatpush1.msra.mxu0 0.0
        %469 = vmatprep.subr.mxu0 0.0
        %470 = vmatpush1.msra.mxu0 0.0
        %471 = vmatprep.subr.mxu0 0.0
        %472 = vmatpush1.msra.mxu0 0.0
        %473 = vmatprep.subr.mxu0 0.0
        %474 = vmatpush1.msra.mxu0 0.0
        %475 = vmatprep.subr.mxu0 0.0
        %476 = vmatpush1.msra.mxu0 0.0
        %477 = vmatprep.subr.mxu0 0.0
        %478 = vmatpush1.msra.mxu0 0.0
        %479 = vmatprep.subr.mxu0 0.0
        %480 = vmatpush1.msra.mxu0 0.0
        %481 = vmatprep.subr.mxu0 0.0
        %482 = vmatpush1.msra.mxu0 0.0
        %483 = vmatprep.subr.mxu0 0.0
        %484 = vmatpush1.msra.mxu0 0.0
        %485 = vmatprep.mubr.f32.mxu0 0.0
        %486 = vmatmul.mubr.f32.gmra.mrb[0].mxu0 %v419
        %v487 = vpop.f32.mrb[0].mxu0
        %v488 = vadd.f32 0.0, %v487
        %v489 = vpop.f32.mrb[0].mxu0
        %490 = vdwg.mxu0
        %v491 = vadd.f32 %v417, %v488
        %v492 = vxor.u32 %v491, 2147483648
        %v493 = vmul.f32 %v492, 1.442695
        %v494 = vpow.pop %v493
        %v495 = vadd.f32 %v494, 1.0
        %v496 = vrcp.pop %v495
        %v497 = vmul.f32 1.0, %v496
        %498 = vrot.lane.b32.xlu0 %v415, 64
        %v499 = vpop.permute.xlu0 %498
        %v501 = vadd.f32 %v488, %v499
        %503 = vrot.lane.b32.xlu0 %v501, 64
        %v504 = vpop.permute.xlu0 %503
        %v506 = vmul.f32 %v497, %v504
        %508 = vrot.lane.b32.xlu0 %v506, 64
        %v509 = vpop.permute.xlu0 %508
        %v511 = vadd.f32 %v417, %v509
        %v512 = vtanh.pop %v511
        %514 = vrot.lane.b32.xlu0 %v512, 64
        %v515 = vpop.permute.xlu0 %514
        %v517 = vsub.f32 %v416, %v515
        %519 = vrot.lane.b32.xlu0 %v517, 32
        %v520 = vpop.permute.xlu0 %519
        %v522 = vmul.f32 %v497, %v520
        %524 = vrot.lane.b32.xlu0 %v522, 32
        %v525 = vpop.permute.xlu0 %524
        %v527 = vadd.f32 %v512, %v525
        %529 = vrot.lane.b32.xlu0 %v527, 64
        %v530 = vpop.permute.xlu0 %529
        %532 = vst.msk [vmem:[%s279] sm:$0xff] %vm307, %v530
        %s533 = scalar_lea.vmem [#allocation3], 8
        %v534 = vld [vmem:[%s533] sm:$0xff]
        %v535 = vsel %vm307, %v530, 0
        %537 = vmatprep.subr.mxu0 0.0
        %538 = vmatpush1.msra.mxu0 %v288
        %539 = vmatprep.subr.mxu0 0.0
        %540 = vmatpush1.msra.mxu0 %v289
        %541 = vmatprep.subr.mxu0 0.0
        %542 = vmatpush1.msra.mxu0 %v290
        %543 = vmatprep.subr.mxu0 0.0
        %544 = vmatpush1.msra.mxu0 %v291
        %545 = vmatprep.subr.mxu0 0.0
        %546 = vmatpush1.msra.mxu0 0.0
        %547 = vmatprep.subr.mxu0 0.0
        %548 = vmatpush1.msra.mxu0 0.0
        %549 = vmatprep.subr.mxu0 0.0
        %550 = vmatpush1.msra.mxu0 0.0
        %551 = vmatprep.subr.mxu0 0.0
        %552 = vmatpush1.msra.mxu0 0.0
        %553 = vmatprep.subr.mxu0 0.0
        %554 = vmatpush1.msra.mxu0 0.0
        %555 = vmatprep.subr.mxu0 0.0
        %556 = vmatpush1.msra.mxu0 0.0
        %557 = vmatprep.subr.mxu0 0.0
        %558 = vmatpush1.msra.mxu0 0.0
        %559 = vmatprep.subr.mxu0 0.0
        %560 = vmatpush1.msra.mxu0 0.0
        %561 = vmatprep.subr.mxu0 0.0
        %562 = vmatpush1.msra.mxu0 0.0
        %563 = vmatprep.subr.mxu0 0.0
        %564 = vmatpush1.msra.mxu0 0.0
        %565 = vmatprep.subr.mxu0 0.0
        %566 = vmatpush1.msra.mxu0 0.0
        %567 = vmatprep.subr.mxu0 0.0
        %568 = vmatpush1.msra.mxu0 0.0
        %569 = vmatprep.subr.mxu0 0.0
        %570 = vmatpush1.msra.mxu0 0.0
        %571 = vmatprep.subr.mxu0 0.0
        %572 = vmatpush1.msra.mxu0 0.0
        %573 = vmatprep.subr.mxu0 0.0
        %574 = vmatpush1.msra.mxu0 0.0
        %575 = vmatprep.subr.mxu0 0.0
        %576 = vmatpush1.msra.mxu0 0.0
        %577 = vmatprep.subr.mxu0 0.0
        %578 = vmatpush1.msra.mxu0 0.0
        %579 = vmatprep.subr.mxu0 0.0
        %580 = vmatpush1.msra.mxu0 0.0
        %581 = vmatprep.subr.mxu0 0.0
        %582 = vmatpush1.msra.mxu0 0.0
        %583 = vmatprep.subr.mxu0 0.0
        %584 = vmatpush1.msra.mxu0 0.0
        %585 = vmatprep.subr.mxu0 0.0
        %586 = vmatpush1.msra.mxu0 0.0
        %587 = vmatprep.subr.mxu0 0.0
        %588 = vmatpush1.msra.mxu0 0.0
        %589 = vmatprep.subr.mxu0 0.0
        %590 = vmatpush1.msra.mxu0 0.0
        %591 = vmatprep.subr.mxu0 0.0
        %592 = vmatpush1.msra.mxu0 0.0
        %593 = vmatprep.subr.mxu0 0.0
        %594 = vmatpush1.msra.mxu0 0.0
        %595 = vmatprep.subr.mxu0 0.0
        %596 = vmatpush1.msra.mxu0 0.0
        %597 = vmatprep.subr.mxu0 0.0
        %598 = vmatpush1.msra.mxu0 0.0
        %599 = vmatprep.subr.mxu0 0.0
        %600 = vmatpush1.msra.mxu0 0.0
        %601 = vmatprep.mubr.f32.mxu0 0.0
        %602 = vmatmul.mubr.f32.gmra.mrb[0].mxu0 %v535
        %v603 = vpop.f32.mrb[0].mxu0
        %v604 = vadd.f32 0.0, %v603
        %v605 = vpop.f32.mrb[0].mxu0
        %606 = vdwg.mxu0
        %v607 = vadd.f32 %v534, %v604
        %v608 = vxor.u32 %v607, 2147483648
        %v609 = vmul.f32 %v608, 1.442695
        %v610 = vpow.pop %v609
        %v611 = vadd.f32 %v610, 1.0
        %v612 = vrcp.pop %v611
        %v613 = vmul.f32 1.0, %v612
        %v614 = vadd.f32 %v604, %v499
        %616 = vrot.lane.b32.xlu0 %v614, 64
        %v617 = vpop.permute.xlu0 %616
        %v619 = vmul.f32 %v613, %v617
        %621 = vrot.lane.b32.xlu0 %v619, 64
        %v622 = vpop.permute.xlu0 %621
        %v624 = vadd.f32 %v534, %v622
        %v625 = vtanh.pop %v624
        %v626 = vsub.f32 %v527, %v625
        %628 = vrot.lane.b32.xlu0 %v626, 96
        %v629 = vpop.permute.xlu0 %628
        %v631 = vmul.f32 %v613, %v629
        %633 = vrot.lane.b32.xlu0 %v631, 32
        %v634 = vpop.permute.xlu0 %633
        %v636 = vadd.f32 %v625, %v634
        %638 = vrot.lane.b32.xlu0 %v636, 64
        %v639 = vpop.permute.xlu0 %638
        %s641 = scalar_lea.vmem %s279, 8
        %642 = vst.msk [vmem:[%s641] sm:$0xff] %vm307, %v639
        %s643 = scalar_lea.vmem [#allocation3], 16
        %v644 = vld [vmem:[%s643] sm:$0xff]
        %v645 = vsel %vm307, %v639, 0
        %647 = vmatprep.subr.mxu0 0.0
        %648 = vmatpush1.msra.mxu0 %v288
        %649 = vmatprep.subr.mxu0 0.0
        %650 = vmatpush1.msra.mxu0 %v289
        %651 = vmatprep.subr.mxu0 0.0
        %652 = vmatpush1.msra.mxu0 %v290
        %653 = vmatprep.subr.mxu0 0.0
        %654 = vmatpush1.msra.mxu0 %v291
        %655 = vmatprep.subr.mxu0 0.0
        %656 = vmatpush1.msra.mxu0 0.0
        %657 = vmatprep.subr.mxu0 0.0
        %658 = vmatpush1.msra.mxu0 0.0
        %659 = vmatprep.subr.mxu0 0.0
        %660 = vmatpush1.msra.mxu0 0.0
        %661 = vmatprep.subr.mxu0 0.0
        %662 = vmatpush1.msra.mxu0 0.0
        %663 = vmatprep.subr.mxu0 0.0
        %664 = vmatpush1.msra.mxu0 0.0
        %665 = vmatprep.subr.mxu0 0.0
        %666 = vmatpush1.msra.mxu0 0.0
        %667 = vmatprep.subr.mxu0 0.0
        %668 = vmatpush1.msra.mxu0 0.0
        %669 = vmatprep.subr.mxu0 0.0
        %670 = vmatpush1.msra.mxu0 0.0
        %671 = vmatprep.subr.mxu0 0.0
        %672 = vmatpush1.msra.mxu0 0.0
        %673 = vmatprep.subr.mxu0 0.0
        %674 = vmatpush1.msra.mxu0 0.0
        %675 = vmatprep.subr.mxu0 0.0
        %676 = vmatpush1.msra.mxu0 0.0
        %677 = vmatprep.subr.mxu0 0.0
        %678 = vmatpush1.msra.mxu0 0.0
        %679 = vmatprep.subr.mxu0 0.0
        %680 = vmatpush1.msra.mxu0 0.0
        %681 = vmatprep.subr.mxu0 0.0
        %682 = vmatpush1.msra.mxu0 0.0
        %683 = vmatprep.subr.mxu0 0.0
        %684 = vmatpush1.msra.mxu0 0.0
        %685 = vmatprep.subr.mxu0 0.0
        %686 = vmatpush1.msra.mxu0 0.0
        %687 = vmatprep.subr.mxu0 0.0
        %688 = vmatpush1.msra.mxu0 0.0
        %689 = vmatprep.subr.mxu0 0.0
        %690 = vmatpush1.msra.mxu0 0.0
        %691 = vmatprep.subr.mxu0 0.0
        %692 = vmatpush1.msra.mxu0 0.0
        %693 = vmatprep.subr.mxu0 0.0
        %694 = vmatpush1.msra.mxu0 0.0
        %695 = vmatprep.subr.mxu0 0.0
        %696 = vmatpush1.msra.mxu0 0.0
        %697 = vmatprep.subr.mxu0 0.0
        %698 = vmatpush1.msra.mxu0 0.0
        %699 = vmatprep.subr.mxu0 0.0
        %700 = vmatpush1.msra.mxu0 0.0
        %701 = vmatprep.subr.mxu0 0.0
        %702 = vmatpush1.msra.mxu0 0.0
        %703 = vmatprep.subr.mxu0 0.0
        %704 = vmatpush1.msra.mxu0 0.0
        %705 = vmatprep.subr.mxu0 0.0
        %706 = vmatpush1.msra.mxu0 0.0
        %707 = vmatprep.subr.mxu0 0.0
        %708 = vmatpush1.msra.mxu0 0.0
        %709 = vmatprep.subr.mxu0 0.0
        %710 = vmatpush1.msra.mxu0 0.0
        %711 = vmatprep.mubr.f32.mxu0 0.0
        %712 = vmatmul.mubr.f32.gmra.mrb[0].mxu0 %v645
        %v713 = vpop.f32.mrb[0].mxu0
        %v714 = vadd.f32 0.0, %v713
        %v715 = vpop.f32.mrb[0].mxu0
        %716 = vdwg.mxu0
        %v717 = vadd.f32 %v644, %v714
        %v718 = vxor.u32 %v717, 2147483648
        %v719 = vmul.f32 %v718, 1.442695
        %v720 = vpow.pop %v719
        %v721 = vadd.f32 %v720, 1.0
        %v722 = vrcp.pop %v721
        %v723 = vmul.f32 1.0, %v722
        %v724 = vadd.f32 %v714, %v499
        %726 = vrot.lane.b32.xlu0 %v724, 64
        %v727 = vpop.permute.xlu0 %726
        %v729 = vmul.f32 %v723, %v727
        %731 = vrot.lane.b32.xlu0 %v729, 64
        %v732 = vpop.permute.xlu0 %731
        %v734 = vadd.f32 %v644, %v732
        %v735 = vtanh.pop %v734
        %v736 = vsub.f32 %v636, %v735
        %738 = vrot.lane.b32.xlu0 %v736, 96
        %v739 = vpop.permute.xlu0 %738
        %v741 = vmul.f32 %v723, %v739
        %743 = vrot.lane.b32.xlu0 %v741, 32
        %v744 = vpop.permute.xlu0 %743
        %v746 = vadd.f32 %v735, %v744
        %748 = vrot.lane.b32.xlu0 %v746, 64
        %v749 = vpop.permute.xlu0 %748
        %s751 = scalar_lea.vmem %s279, 16
        %752 = vst.msk [vmem:[%s751] sm:$0xff] %vm307, %v749
        %s753 = scalar_lea.vmem [#allocation3], 24
        %v754 = vld [vmem:[%s753] sm:$0xff]
        %v755 = vsel %vm307, %v749, 0
        %757 = vmatprep.subr.mxu0 0.0
        %758 = vmatpush1.msra.mxu0 %v288
        %759 = vmatprep.subr.mxu0 0.0
        %760 = vmatpush1.msra.mxu0 %v289
        %761 = vmatprep.subr.mxu0 0.0
        %762 = vmatpush1.msra.mxu0 %v290
        %763 = vmatprep.subr.mxu0 0.0
        %764 = vmatpush1.msra.mxu0 %v291
        %765 = vmatprep.subr.mxu0 0.0
        %766 = vmatpush1.msra.mxu0 0.0
        %767 = vmatprep.subr.mxu0 0.0
        %768 = vmatpush1.msra.mxu0 0.0
        %769 = vmatprep.subr.mxu0 0.0
        %770 = vmatpush1.msra.mxu0 0.0
        %771 = vmatprep.subr.mxu0 0.0
        %772 = vmatpush1.msra.mxu0 0.0
        %773 = vmatprep.subr.mxu0 0.0
        %774 = vmatpush1.msra.mxu0 0.0
        %775 = vmatprep.subr.mxu0 0.0
        %776 = vmatpush1.msra.mxu0 0.0
        %777 = vmatprep.subr.mxu0 0.0
        %778 = vmatpush1.msra.mxu0 0.0
        %779 = vmatprep.subr.mxu0 0.0
        %780 = vmatpush1.msra.mxu0 0.0
        %781 = vmatprep.subr.mxu0 0.0
        %782 = vmatpush1.msra.mxu0 0.0
        %783 = vmatprep.subr.mxu0 0.0
        %784 = vmatpush1.msra.mxu0 0.0
        %785 = vmatprep.subr.mxu0 0.0
        %786 = vmatpush1.msra.mxu0 0.0
        %787 = vmatprep.subr.mxu0 0.0
        %788 = vmatpush1.msra.mxu0 0.0
        %789 = vmatprep.subr.mxu0 0.0
        %790 = vmatpush1.msra.mxu0 0.0
        %791 = vmatprep.subr.mxu0 0.0
        %792 = vmatpush1.msra.mxu0 0.0
        %793 = vmatprep.subr.mxu0 0.0
        %794 = vmatpush1.msra.mxu0 0.0
        %795 = vmatprep.subr.mxu0 0.0
        %796 = vmatpush1.msra.mxu0 0.0
        %797 = vmatprep.subr.mxu0 0.0
        %798 = vmatpush1.msra.mxu0 0.0
        %799 = vmatprep.subr.mxu0 0.0
        %800 = vmatpush1.msra.mxu0 0.0
        %801 = vmatprep.subr.mxu0 0.0
        %802 = vmatpush1.msra.mxu0 0.0
        %803 = vmatprep.subr.mxu0 0.0
        %804 = vmatpush1.msra.mxu0 0.0
        %805 = vmatprep.subr.mxu0 0.0
        %806 = vmatpush1.msra.mxu0 0.0
        %807 = vmatprep.subr.mxu0 0.0
        %808 = vmatpush1.msra.mxu0 0.0
        %809 = vmatprep.subr.mxu0 0.0
        %810 = vmatpush1.msra.mxu0 0.0
        %811 = vmatprep.subr.mxu0 0.0
        %812 = vmatpush1.msra.mxu0 0.0
        %813 = vmatprep.subr.mxu0 0.0
        %814 = vmatpush1.msra.mxu0 0.0
        %815 = vmatprep.subr.mxu0 0.0
        %816 = vmatpush1.msra.mxu0 0.0
        %817 = vmatprep.subr.mxu0 0.0
        %818 = vmatpush1.msra.mxu0 0.0
        %819 = vmatprep.subr.mxu0 0.0
        %820 = vmatpush1.msra.mxu0 0.0
        %821 = vmatprep.mubr.f32.mxu0 0.0
        %822 = vmatmul.mubr.f32.gmra.mrb[0].mxu0 %v755
        %v823 = vpop.f32.mrb[0].mxu0
        %v824 = vadd.f32 0.0, %v823
        %v825 = vpop.f32.mrb[0].mxu0
        %826 = vdwg.mxu0
        %v827 = vadd.f32 %v754, %v824
        %v828 = vxor.u32 %v827, 2147483648
        %v829 = vmul.f32 %v828, 1.442695
        %v830 = vpow.pop %v829
        %v831 = vadd.f32 %v830, 1.0
        %v832 = vrcp.pop %v831
        %v833 = vmul.f32 1.0, %v832
        %v834 = vadd.f32 %v824, %v499
        %836 = vrot.lane.b32.xlu0 %v834, 64
        %v837 = vpop.permute.xlu0 %836
        %v839 = vmul.f32 %v833, %v837
        %841 = vrot.lane.b32.xlu0 %v839, 64
        %v842 = vpop.permute.xlu0 %841
        %v844 = vadd.f32 %v754, %v842
        %v845 = vtanh.pop %v844
        %v846 = vsub.f32 %v746, %v845
        %848 = vrot.lane.b32.xlu0 %v846, 96
        %v849 = vpop.permute.xlu0 %848
        %v851 = vmul.f32 %v833, %v849
        %853 = vrot.lane.b32.xlu0 %v851, 32
        %v854 = vpop.permute.xlu0 %853
        %v856 = vadd.f32 %v845, %v854
        %858 = vrot.lane.b32.xlu0 %v856, 64
        %v859 = vpop.permute.xlu0 %858
        %s861 = scalar_lea.vmem %s279, 24
        %862 = vst.msk [vmem:[%s861] sm:$0xff] %vm307, %v859
        %863 = vst.msk [vmem:[#allocation2] sm:$0xff] %vm307, %v859
        %p864 = scmp.eq.s32.totalorder %s20, 1
        // Predicated region
        $region49: #{tpu_custom_call.1} parent=43 // pred_check
          %p865 = pneg %p864
        $region50: #{tpu_custom_call.1} parent=43 // pred_check_branch
          %867 = sbr.rel (%p865) target = $region52
        $region51: #{tpu_custom_call.1} parent=43 // pred_region
          %868 = vst.msk [vmem:[#allocation4] sm:$0xff] %vm307, %v859
        $region52: #{tpu_custom_call.1} parent=43 // pred_fallthru
          _
        %s869 = smul.u32 4, %s20
        %p870 = scmp.lt.s32.totalorder %s869, 7
        %s871 = scalar_select %p870, %s869, 7
        %s872 = smul.addr %s871, 8
        %s873 = scalar_lea.vmem %s6, %s872
        // Predicated region
        $region53: #{tpu_custom_call.1} parent=43 // pred_check
          %p874 = pneg %p169
        $region54: #{tpu_custom_call.1} parent=43 // pred_check_branch
          %876 = sbr.rel (%p874) target = $region56
        $region55: #{tpu_custom_call.1} parent=43 // pred_region
          %s877 = smul.u32 4, %s20
        $region56: #{tpu_custom_call.1} parent=43 // pred_fallthru
          _
        // Predicated region
        $region57: #{tpu_custom_call.1} parent=43 // pred_check
          %p878 = pneg %p190
        $region58: #{tpu_custom_call.1} parent=43 // pred_check_branch
          %880 = sbr.rel (%p878) target = $region60
        $region59: #{tpu_custom_call.1} parent=43 // pred_region
          %s882 = ssub.s32 128, 128
          %883 = vsyncadd [#allocation5], %s882
          %s885 = sshll.u32 [#allocation4], 4
          %s886 = int_to_ptr.vmem [resolvable:$true] %s885
          %888 = dma.vmem_to_hbm [thread:$0]  %s886, 128, %s7, [#allocation5]
        $region60: #{tpu_custom_call.1} parent=43 // pred_fallthru
          _
        // Predicated region
        $region61: #{tpu_custom_call.1} parent=43 // pred_check
          %p889 = pneg %p190
        $region62: #{tpu_custom_call.1} parent=43 // pred_check_branch
          %891 = sbr.rel (%p889) target = $region64
        $region63: #{tpu_custom_call.1} parent=43 // pred_region
          %892 = dma.done [#allocation5], 128
        $region64: #{tpu_custom_call.1} parent=43 // pred_fallthru
          _
      $region44: #{tpu_custom_call.1} parent=5 // pred_fallthru
        _
      %p893 = scmp.le.s32.totalorder 2, %s15
      // Predicated region
      $region65: #{tpu_custom_call.1} parent=5 // pred_check
        %p894 = pneg %p893
      $region66: #{tpu_custom_call.1} parent=5 // pred_check_branch
        %896 = sbr.rel (%p894) target = $region68
      $region67: #{tpu_custom_call.1} parent=5 // pred_region
        %s897 = ssub.s32 %s15, 2
        // Predicated region
        $region69: #{tpu_custom_call.1} parent=67 // pred_check
          %p898 = pneg %p175
        $region70: #{tpu_custom_call.1} parent=67 // pred_check_branch
          %900 = sbr.rel (%p898) target = $region72
        $region71: #{tpu_custom_call.1} parent=67 // pred_region
          %s901 = smul.u32 4, %s21
          %p902 = scmp.lt.s32.totalorder %s901, 7
          %s903 = scalar_select %p902, %s901, 7
          %s904 = smul.addr %s903, 8
          %s905 = scalar_lea.vmem %s6, %s904
        $region72: #{tpu_custom_call.1} parent=67 // pred_fallthru
          _
      $region68: #{tpu_custom_call.1} parent=5 // pred_fallthru
        _
    $region6: #{tpu_custom_call.1} parent=1 // loop_footer
      %s19 = sadd.s32 1, %s15
    $region7: #{tpu_custom_call.1} parent=1 // loop_footer_branch
      %14 = sbr.rel target = $region3
    $region8: #{tpu_custom_call.1} parent=1 // loop_exit
      _
    %906 = vsyncpa [#allocation5], 1
    %s907 = scalar_lea.sflag [#allocation5], 1
    %908 = vsyncpa %s907, 1

</llo_original>
